<compile_context>
chip_gen: v7x
topology: tpu7x:2x2x1
jax: 0.10.0
libtpu: 0.0.40
codegen_flags: <defaults>
</compile_context>

<pallas_src>
import functools

import jax
import jax.numpy as jnp
from jax.experimental import pallas as pl
from jax.experimental.pallas import tpu as pltpu


def _round_up(n, m):
    return (n + m - 1) // m * m


def mlp_kernel(x_ref, w1_ref, b1_ref, w2_ref, b2_ref, o_ref):
    # fc1: (TB, IN) bf16 @ (IN, Hp) bf16 -> f32 accumulate on the MXU.
    h = jnp.dot(x_ref[...], w1_ref[...], preferred_element_type=jnp.float32)
    # Bias + ReLU epilogue in f32 on the VPU (b1 broadcasts (1, Hp) over batch).
    h = jnp.maximum(h + b1_ref[...], 0.0)
    # fc2: cast activations back to bf16 for the second MXU matmul.
    y = jnp.dot(h.astype(jnp.bfloat16), w2_ref[...],
                preferred_element_type=jnp.float32)
    o_ref[...] = (y + b2_ref[...]).astype(o_ref.dtype)


def prepare_params(w1, b1, w2, b2):
    """One-time parameter prep (do NOT call per forward pass).

    Pads the hidden / output lane dims to multiples of 128 and casts the weight
    matrices to bf16 for the MXU. Padding is semantically exact: padded hidden
    units are relu(0 + 0) = 0 and padded w2 rows / output columns are zero (the
    extra logits are sliced off in the forward wrapper).

    w1: (IN, H)   (transposed vs. PyTorch's (H, IN) storage)
    b1: (H,)
    w2: (H, OUT)
    b2: (OUT,)
    """
    H = w1.shape[1]
    OUT = w2.shape[1]
    H_pad = _round_up(H, 128)
    OUT_pad = _round_up(OUT, 128)

    w1_p = jnp.pad(w1, ((0, 0), (0, H_pad - H))).astype(jnp.bfloat16)
    w2_p = jnp.pad(w2, ((0, H_pad - H), (0, OUT_pad - OUT))).astype(jnp.bfloat16)
    b1_p = jnp.pad(b1, (0, H_pad - H)).reshape(1, H_pad).astype(jnp.float32)
    b2_p = jnp.pad(b2, (0, OUT_pad - OUT)).reshape(1, OUT_pad).astype(jnp.float32)
    return w1_p, b1_p, w2_p, b2_p


@functools.partial(jax.jit, static_argnames=("out_features", "max_batch_tile"))
def neural_network_forward(x, w1_p, b1_p, w2_p, b2_p, *, out_features,
                           max_batch_tile=512):
    """Forward pass: relu(x @ w1 + b1) @ w2 + b2 using pre-padded bf16 params.

    x:    (B, IN) float32
    w1_p: (IN, H_pad)     bf16   (from prepare_params)
    b1_p: (1, H_pad)      f32
    w2_p: (H_pad, OUT_pad) bf16
    b2_p: (1, OUT_pad)    f32
    """
    B, IN = x.shape
    H_pad = w1_p.shape[1]
    OUT_pad = w2_p.shape[1]

    # Batch tiling:
    #  - very large batches: stream max_batch_tile-row tiles (512 by default,
    #    ~2 MiB working set -> fits scoped VMEM everywhere, amortizes the
    #    ~0.35us/step pipeline overhead, taller MXU LHS tiles).
    #  - mid-size batches: split into exactly 2 tiles so v7x's two TensorCores
    #    both get work on the "parallel" axis.
    #  - tiny batches: a single tile rounded to 16 rows (bf16 sublane packing).
    if B >= 2 * max_batch_tile:
        TB = max_batch_tile
    elif B > 16:
        TB = _round_up(-(-B // 2), 16)
    else:
        TB = _round_up(max(B, 1), 16)
    B_pad = _round_up(B, TB)
    num_tiles = B_pad // TB

    # Batch-pad + bf16-cast of the activations. allow_input_fusion lets XLA
    # fuse this into the custom call instead of materializing x_p in HBM.
    # TODO(synk): optionally pad K 784->896 for very large, compute-bound batches.
    x_p = jnp.pad(x, ((0, B_pad - B), (0, 0))).astype(jnp.bfloat16)

    cost = pl.CostEstimate(
        flops=2 * B_pad * (IN * H_pad + H_pad * OUT_pad),
        transcendentals=0,
        bytes_accessed=(B_pad * IN * 2 + IN * H_pad * 2 + H_pad * OUT_pad * 2
                        + H_pad * 4 + OUT_pad * 4 + B_pad * OUT_pad * 4),
    )

    out_pad = pl.pallas_call(
        mlp_kernel,
        out_shape=jax.ShapeDtypeStruct((B_pad, OUT_pad), jnp.float32),
        grid_spec=pltpu.PrefetchScalarGridSpec(
            num_scalar_prefetch=0,
            grid=(num_tiles,),
            in_specs=[
                # x / out stream per batch tile; weights & biases keep a
                # constant block index so they are DMA'd once and reused.
                pl.BlockSpec((TB, IN), lambda i: (i, 0)),
                pl.BlockSpec((IN, H_pad), lambda i: (0, 0)),
                pl.BlockSpec((1, H_pad), lambda i: (0, 0)),
                pl.BlockSpec((H_pad, OUT_pad), lambda i: (0, 0)),
                pl.BlockSpec((1, OUT_pad), lambda i: (0, 0)),
            ],
            out_specs=pl.BlockSpec((TB, OUT_pad), lambda i: (i, 0)),
        ),
        compiler_params=pltpu.CompilerParams(
            # Batch tiles are independent -> shard across v7x's 2 TensorCores.
            dimension_semantics=("parallel",),
            # Fuse the pad/cast producing x_p into the custom call input.
            allow_input_fusion=[True, False, False, False, False],
        ),
        cost_estimate=cost,
    )(x_p, w1_p, b1_p, w2_p, b2_p)

    # Padded batch rows of out_pad contain garbage (relu(b1) @ w2 + b2) and the
    # padded output columns are exact zeros; both are sliced off here.
    return out_pad[:B, :out_features]


def init_linear_params(key, fan_in, fan_out, dtype=jnp.float32):
    """PyTorch nn.Linear default init: U(-1/sqrt(fan_in), 1/sqrt(fan_in))."""
    kw, kb = jax.random.split(key)
    bound = 1.0 / jnp.sqrt(jnp.asarray(fan_in, dtype))
    # Stored as (in, out), i.e. transpose of PyTorch's (out, in) weight.
    w = jax.random.uniform(kw, (fan_in, fan_out), dtype, -bound, bound)
    b = jax.random.uniform(kb, (fan_out,), dtype, -bound, bound)
    return w, b


if __name__ == "__main__":
    input_size = 784
    hidden_layer = 400
    output_size = 10
    batch = 8

    key = jax.random.PRNGKey(0)
    kx, k1, k2 = jax.random.split(key, 3)

    x = jax.random.normal(kx, (batch, input_size), jnp.float32)
    w1, b1 = init_linear_params(k1, input_size, hidden_layer)
    w2, b2 = init_linear_params(k2, hidden_layer, output_size)

    # One-time weight prep (padding + bf16 cast), cached outside the forward.
    w1_p, b1_p, w2_p, b2_p = jax.block_until_ready(
        prepare_params(w1, b1, w2, b2))

    out = neural_network_forward(x, w1_p, b1_p, w2_p, b2_p,
                                 out_features=output_size)
    out = jax.block_until_ready(out)
    assert out.shape == (batch, output_size)

    # Reference with the same bf16-weight / f32-accumulate pipeline.
    h_ref = jnp.maximum(
        jnp.dot(x.astype(jnp.bfloat16), w1.astype(jnp.bfloat16),
                preferred_element_type=jnp.float32) + b1, 0.0)
    ref_bf16 = jnp.dot(h_ref.astype(jnp.bfloat16), w2.astype(jnp.bfloat16),
                       preferred_element_type=jnp.float32) + b2
    assert jnp.allclose(out, ref_bf16, atol=1e-2, rtol=1e-2)

    # Sanity check against full-f32 PyTorch semantics (bf16 quantization noise).
    ref_f32 = jnp.maximum(x @ w1 + b1, 0.0) @ w2 + b2
    assert jnp.allclose(out, ref_f32, atol=5e-2, rtol=5e-2)

    print("KERNEL_OK")
</pallas_src>

<mosaic_0001>
module attributes {stable_mosaic.version = 11 : i64} {
  func.func @mlp_kernel(%arg0: i32, %arg1: memref<16x784xbf16, #tpu.memory_space<vmem>>, %arg2: memref<784x512xbf16, #tpu.memory_space<vmem>>, %arg3: memref<1x512xf32, #tpu.memory_space<vmem>>, %arg4: memref<512x128xbf16, #tpu.memory_space<vmem>>, %arg5: memref<1x128xf32, #tpu.memory_space<vmem>>, %arg6: memref<16x128xf32, #tpu.memory_space<vmem>>) attributes {dimension_semantics = [#tpu.dimension_semantics<parallel>], iteration_bounds = array<i64: 1>, scalar_prefetch = 0 : i64, scratch_operands = 0 : i64, tpu.core_type = #tpu.core_type<tc>, window_params = [{transform_indices = @transform_0, window_bounds = array<i64: 16, 784>}, {pipeline_mode = #tpu.pipeline_mode<synchronous>, transform_indices = @transform_1, window_bounds = array<i64: 784, 512>}, {pipeline_mode = #tpu.pipeline_mode<synchronous>, transform_indices = @transform_2, window_bounds = array<i64: 1, 512>}, {pipeline_mode = #tpu.pipeline_mode<synchronous>, transform_indices = @transform_3, window_bounds = array<i64: 512, 128>}, {pipeline_mode = #tpu.pipeline_mode<synchronous>, transform_indices = @transform_4, window_bounds = array<i64: 1, 128>}, {transform_indices = @transform_5, window_bounds = array<i64: 16, 128>}]} {
    %c0 = arith.constant 0 : index
    %c0_0 = arith.constant 0 : index
    %0 = vector.load %arg1[%c0, %c0_0] : memref<16x784xbf16, #tpu.memory_space<vmem>>, vector<16x784xbf16>
    %c0_1 = arith.constant 0 : index
    %c0_2 = arith.constant 0 : index
    %1 = vector.load %arg2[%c0_1, %c0_2] : memref<784x512xbf16, #tpu.memory_space<vmem>>, vector<784x512xbf16>
    %cst = arith.constant dense<0.000000e+00> : vector<16x512xf32>
    %2 = tpu.matmul %0, %1, %cst {dimension_numbers = #tpu.dot_dimension_numbers<[1], [0], [0], [1], [0, 0, 1, 1], [], []>} : vector<16x784xbf16>, vector<784x512xbf16>, vector<16x512xf32> -> vector<16x512xf32>
    %c0_3 = arith.constant 0 : index
    %c0_4 = arith.constant 0 : index
    %3 = vector.load %arg3[%c0_3, %c0_4] : memref<1x512xf32, #tpu.memory_space<vmem>>, vector<1x512xf32>
    %4 = vector.broadcast %3 : vector<1x512xf32> to vector<16x512xf32>
    %5 = arith.addf %2, %4 : vector<16x512xf32>
    %cst_5 = arith.constant 0.000000e+00 : f32
    %6 = vector.broadcast %cst_5 : f32 to vector<16x512xf32>
    %7 = arith.maximumf %5, %6 : vector<16x512xf32>
    %8 = arith.truncf %7 : vector<16x512xf32> to vector<16x512xbf16>
    %c0_6 = arith.constant 0 : index
    %c0_7 = arith.constant 0 : index
    %9 = vector.load %arg4[%c0_6, %c0_7] : memref<512x128xbf16, #tpu.memory_space<vmem>>, vector<512x128xbf16>
    %cst_8 = arith.constant dense<0.000000e+00> : vector<16x128xf32>
    %10 = tpu.matmul %8, %9, %cst_8 {dimension_numbers = #tpu.dot_dimension_numbers<[1], [0], [0], [1], [0, 0, 1, 1], [], []>} : vector<16x512xbf16>, vector<512x128xbf16>, vector<16x128xf32> -> vector<16x128xf32>
    %c0_9 = arith.constant 0 : index
    %c0_10 = arith.constant 0 : index
    %11 = vector.load %arg5[%c0_9, %c0_10] : memref<1x128xf32, #tpu.memory_space<vmem>>, vector<1x128xf32>
    %12 = vector.broadcast %11 : vector<1x128xf32> to vector<16x128xf32>
    %13 = arith.addf %10, %12 : vector<16x128xf32>
    %c0_11 = arith.constant 0 : index
    %c0_12 = arith.constant 0 : index
    %14 = vector.load %arg6[%c0_11, %c0_12] : memref<16x128xf32, #tpu.memory_space<vmem>>, vector<16x128xf32>
    tpu.vector_store %arg6[%c0_11, %c0_12], %13 {strides = array<i32>} : memref<16x128xf32, #tpu.memory_space<vmem>>, vector<16x128xf32>,
    return
  }
  func.func @transform_0(%arg0: i32) -> (i32, i32) {
    %c0_i32 = arith.constant 0 : i32
    %c0_i32_0 = arith.constant 0 : i32
    return %arg0, %c0_i32 : i32, i32
  }
  func.func @transform_1(%arg0: i32) -> (i32, i32) {
    %c0_i32 = arith.constant 0 : i32
    %c0_i32_0 = arith.constant 0 : i32
    %c0_i32_1 = arith.constant 0 : i32
    return %c0_i32, %c0_i32_0 : i32, i32
  }
  func.func @transform_2(%arg0: i32) -> (i32, i32) {
    %c0_i32 = arith.constant 0 : i32
    %c0_i32_0 = arith.constant 0 : i32
    %c0_i32_1 = arith.constant 0 : i32
    return %c0_i32, %c0_i32_0 : i32, i32
  }
  func.func @transform_3(%arg0: i32) -> (i32, i32) {
    %c0_i32 = arith.constant 0 : i32
    %c0_i32_0 = arith.constant 0 : i32
    %c0_i32_1 = arith.constant 0 : i32
    return %c0_i32, %c0_i32_0 : i32, i32
  }
  func.func @transform_4(%arg0: i32) -> (i32, i32) {
    %c0_i32 = arith.constant 0 : i32
    %c0_i32_0 = arith.constant 0 : i32
    %c0_i32_1 = arith.constant 0 : i32
    return %c0_i32, %c0_i32_0 : i32, i32
  }
  func.func @transform_5(%arg0: i32) -> (i32, i32) {
    %c0_i32 = arith.constant 0 : i32
    %c0_i32_0 = arith.constant 0 : i32
    return %arg0, %c0_i32 : i32, i32
  }
}

</mosaic_0001>

<llo_original>
// kernel: neural_network_forward.2
$region0: #{neural_network_forward.2}
  #allocation0 [shape = 'u32[]', space=smem, size = 0x4, offset = 0x4, fixed_abs, tag = 'smem constant byte address 0x4 - core index']
  #allocation1 [shape = 'u32[144,128]{1,0:T(1,128)}', space=vmem, size = 0x12000, scoped, tag = 'internal scratch']
  #allocation2 [shape = 'u32[2048]{0}', space=vmem, size = 0x2000, scoped, tag = 'scoped memory for neural_network_forward.2']
  #allocation3 [shape = 'u32[2048]{0}', space=vmem, size = 0x2000, scoped, tag = 'scoped memory for neural_network_forward.2']
  #allocation4 [shape = 'u32[2048]{0}', space=vmem, size = 0x2000, scoped, tag = 'scoped memory for neural_network_forward.2']
  #allocation5 [shape = 'u32[2048]{0}', space=vmem, size = 0x2000, scoped, tag = 'scoped memory for neural_network_forward.2']
  #allocation6 [shape = 'u32[2048]{0}', space=vmem, size = 0x2000, scoped, tag = 'scoped memory for neural_network_forward.2']
  %s0 = inlined_call_operand.hbm [shape: bf16[784,512], index: 0, kind: input, shape index: {}]
  %s1 = inlined_call_operand.vmem [shape: f32[1,512], index: 1, kind: input, shape index: {}]
  %s2 = inlined_call_operand.hbm [shape: bf16[512,128], index: 2, kind: input, shape index: {}]
  %s3 = inlined_call_operand.vmem [shape: f32[1,128], index: 3, kind: input, shape index: {}]
  %s4 = inlined_call_operand.vmem [shape: bf16[8,784], index: 4, kind: input, shape index: {}]
  %s5 = inlined_call_operand.<no memory space> [shape: bf16[], index: 5, kind: input, shape index: {}]
  %s6 = inlined_call_operand.vmem [shape: f32[16,128], index: 6, kind: output, shape index: {}]
  %s7 = sld [smem:[#allocation0]]
  $region38: #{neural_network_forward.2} parent=0
    _
  %s9 = ssub.s32 1, %s7
  %s10 = scalar_select 0, %s9, %s7
  %v11 = vstv %s5
  %v12 = vunpack.i.l.bf16 %v11
  %v14 = vunpack.i.h.bf16 %v11
  $region1: #{neural_network_forward.2} parent=0
    #allocation7 [shape = 'u8[802816]{0}', space=vmem, size = 0xc4000, scoped, tag = 'input window, operand 1, single buffered']
    #allocation8 [shape = 's32[1]{0}', space=sflag, size = 0x4, scoped, tag = 'scoped memory for neural_network_forward.2']
    #allocation9 [shape = 'u8[131072]{0}', space=vmem, size = 0x20000, scoped, tag = 'input window, operand 3, single buffered']
    #allocation10 [shape = 's32[1]{0}', space=sflag, size = 0x4, scoped, tag = 'scoped memory for neural_network_forward.2']
    #allocation11 [shape = 'u8[28672]{0}', space=vmem, size = 0x7000, dematerialized = true, scoped, tag = 'FusionAdapter Buffer %fusion.1 = bf16[16,784]{1,0:T(8,128)(2,1)} fusion(%param_4.1, %param_5), kind=kLoop, calls=%fused_computation.1.clone, metadata={op_name="jit(neural_network_forward)/jit(_pad)/pad" stack_frame_id=1}']
    %16 = vsyncpa [#allocation8], 0
    %17 = vsyncpa [#allocation10], 0
    // Predicated region
    $region2: #{neural_network_forward.2} parent=1 // pred_check
      _
    $region3: #{neural_network_forward.2} parent=1 // pred_check_branch
      %19 = sbr.rel (0) target = $region5
    $region4: #{neural_network_forward.2} parent=1 // pred_region
      _
    $region5: #{neural_network_forward.2} parent=1 // pred_fallthru
      _
    // Predicated region
    $region6: #{neural_network_forward.2} parent=1 // pred_check
      _
    $region7: #{neural_network_forward.2} parent=1 // pred_check_branch
      %21 = sbr.rel (0) target = $region9
    $region8: #{neural_network_forward.2} parent=1 // pred_region
      %s23 = ssub.s32 25088, 25088
      %24 = vsyncadd [#allocation8], %s23
      %s25 = sshll.u32 [#allocation7], 4
      %s26 = int_to_ptr.vmem [resolvable:$true] %s25
      %31 = dma.hbm_to_vmem [thread:$0]  %s0, 25088, %s26, [#allocation8], 256, 256, 16
    $region9: #{neural_network_forward.2} parent=1 // pred_fallthru
      _
    // Predicated region
    $region10: #{neural_network_forward.2} parent=1 // pred_check
      _
    $region11: #{neural_network_forward.2} parent=1 // pred_check_branch
      %33 = sbr.rel (0) target = $region13
    $region12: #{neural_network_forward.2} parent=1 // pred_region
      _
    $region13: #{neural_network_forward.2} parent=1 // pred_fallthru
      _
    // Predicated region
    $region14: #{neural_network_forward.2} parent=1 // pred_check
      _
    $region15: #{neural_network_forward.2} parent=1 // pred_check_branch
      %35 = sbr.rel (0) target = $region17
    $region16: #{neural_network_forward.2} parent=1 // pred_region
      %s37 = ssub.s32 4096, 4096
      %38 = vsyncadd [#allocation10], %s37
      %s39 = sshll.u32 [#allocation9], 4
      %s40 = int_to_ptr.vmem [resolvable:$true] %s39
      %45 = dma.hbm_to_vmem [thread:$0]  %s2, 4096, %s40, [#allocation10], 64, 64, 4
    $region17: #{neural_network_forward.2} parent=1 // pred_fallthru
      _
    // Predicated region
    $region18: #{neural_network_forward.2} parent=1 // pred_check
      _
    $region19: #{neural_network_forward.2} parent=1 // pred_check_branch
      %47 = sbr.rel (0) target = $region21
    $region20: #{neural_network_forward.2} parent=1 // pred_region
      _
    $region21: #{neural_network_forward.2} parent=1 // pred_fallthru
      _
    // Predicated region
    $region22: #{neural_network_forward.2} parent=1 // pred_check
      _
    $region23: #{neural_network_forward.2} parent=1 // pred_check_branch
      %49 = sbr.rel (0) target = $region25
    $region24: #{neural_network_forward.2} parent=1 // pred_region
      %50 = dma.done [#allocation8], 25088
    $region25: #{neural_network_forward.2} parent=1 // pred_fallthru
      _
    // Predicated region
    $region26: #{neural_network_forward.2} parent=1 // pred_check
      _
    $region27: #{neural_network_forward.2} parent=1 // pred_check_branch
      %52 = sbr.rel (0) target = $region29
    $region28: #{neural_network_forward.2} parent=1 // pred_region
      %53 = dma.done [#allocation10], 4096
    $region29: #{neural_network_forward.2} parent=1 // pred_fallthru
      _
    %s55 = sor.u32 255, 127
    %s56 = sand.u32 %s55, 85
    %s57 = sshrl.u32 %s56, 1
    %s58 = sor.u32 %s56, %s57
    %s59 = sand.u32 51, %s58
    %s60 = sshrl.u32 %s59, 2
    %s61 = sor.u32 %s59, %s60
    %s62 = sand.u32 15, %s61
    %v63 = vld [vmem:[%s4] sm:%s62]
    %v64 = vunpack.c.l.bf16 %v63
    %v65 = vunpack.c.h.bf16 %v63
    %v66 = vlaneseq
    %v67 = vand.u32 %v66, 127
    %vm69 = vcmp.lt.s32.totalorder %v67, 784
    %v70 = vsel %vm69, %v64, %v12
    %v71 = vpack.c.bf16 0.0, %v70
    %73 = vst [vmem:[#allocation11] sm:$0xf] %v71
    %s74 = scalar_lea.vmem %s4, 4
    %s76 = sor.u32 255, 127
    %s77 = sand.u32 %s76, 85
    %s78 = sshrl.u32 %s77, 1
    %s79 = sor.u32 %s77, %s78
    %s80 = sand.u32 51, %s79
    %s81 = sshrl.u32 %s80, 2
    %s82 = sor.u32 %s80, %s81
    %s83 = sand.u32 15, %s82
    %v84 = vld [vmem:[%s74] sm:%s83]
    %v85 = vunpack.c.l.bf16 %v84
    %v86 = vunpack.c.h.bf16 %v84
    %v87 = vlaneseq
    %v88 = vand.u32 %v87, 127
    %v89 = vadd.s32 %v88, 128
    %vm90 = vcmp.lt.s32.totalorder %v89, 784
    %v91 = vsel %vm90, %v85, %v12
    %s92 = scalar_lea.vmem [#allocation11], 4
    %v93 = vpack.c.bf16 0.0, %v91
    %95 = vst [vmem:[%s92] sm:$0xf] %v93
    %s96 = scalar_lea.vmem %s4, 8
    %s98 = sor.u32 255, 127
    %s99 = sand.u32 %s98, 85
    %s100 = sshrl.u32 %s99, 1
    %s101 = sor.u32 %s99, %s100
    %s102 = sand.u32 51, %s101
    %s103 = sshrl.u32 %s102, 2
    %s104 = sor.u32 %s102, %s103
    %s105 = sand.u32 15, %s104
    %v106 = vld [vmem:[%s96] sm:%s105]
    %v107 = vunpack.c.l.bf16 %v106
    %v108 = vunpack.c.h.bf16 %v106
    %v109 = vlaneseq
    %v110 = vand.u32 %v109, 127
    %v111 = vadd.s32 %v110, 256
    %vm112 = vcmp.lt.s32.totalorder %v111, 784
    %v113 = vsel %vm112, %v107, %v12
    %s114 = scalar_lea.vmem [#allocation11], 8
    %v115 = vpack.c.bf16 0.0, %v113
    %117 = vst [vmem:[%s114] sm:$0xf] %v115
    %s118 = scalar_lea.vmem %s4, 12
    %s120 = sor.u32 255, 127
    %s121 = sand.u32 %s120, 85
    %s122 = sshrl.u32 %s121, 1
    %s123 = sor.u32 %s121, %s122
    %s124 = sand.u32 51, %s123
    %s125 = sshrl.u32 %s124, 2
    %s126 = sor.u32 %s124, %s125
    %s127 = sand.u32 15, %s126
    %v128 = vld [vmem:[%s118] sm:%s127]
    %v129 = vunpack.c.l.bf16 %v128
    %v130 = vunpack.c.h.bf16 %v128
    %v131 = vlaneseq
    %v132 = vand.u32 %v131, 127
    %v133 = vadd.s32 %v132, 384
    %vm134 = vcmp.lt.s32.totalorder %v133, 784
    %v135 = vsel %vm134, %v129, %v12
    %s136 = scalar_lea.vmem [#allocation11], 12
    %v137 = vpack.c.bf16 0.0, %v135
    %139 = vst [vmem:[%s136] sm:$0xf] %v137
    %s140 = scalar_lea.vmem %s4, 16
    %s142 = sor.u32 255, 127
    %s143 = sand.u32 %s142, 85
    %s144 = sshrl.u32 %s143, 1
    %s145 = sor.u32 %s143, %s144
    %s146 = sand.u32 51, %s145
    %s147 = sshrl.u32 %s146, 2
    %s148 = sor.u32 %s146, %s147
    %s149 = sand.u32 15, %s148
    %v150 = vld [vmem:[%s140] sm:%s149]
    %v151 = vunpack.c.l.bf16 %v150
    %v152 = vunpack.c.h.bf16 %v150
    %v153 = vlaneseq
    %v154 = vand.u32 %v153, 127
    %v155 = vadd.s32 %v154, 512
    %vm156 = vcmp.lt.s32.totalorder %v155, 784
    %v157 = vsel %vm156, %v151, %v12
    %s158 = scalar_lea.vmem [#allocation11], 16
    %v159 = vpack.c.bf16 0.0, %v157
    %161 = vst [vmem:[%s158] sm:$0xf] %v159
    %s162 = scalar_lea.vmem %s4, 20
    %s164 = sor.u32 255, 127
    %s165 = sand.u32 %s164, 85
    %s166 = sshrl.u32 %s165, 1
    %s167 = sor.u32 %s165, %s166
    %s168 = sand.u32 51, %s167
    %s169 = sshrl.u32 %s168, 2
    %s170 = sor.u32 %s168, %s169
    %s171 = sand.u32 15, %s170
    %v172 = vld [vmem:[%s162] sm:%s171]
    %v173 = vunpack.c.l.bf16 %v172
    %v174 = vunpack.c.h.bf16 %v172
    %v175 = vlaneseq
    %v176 = vand.u32 %v175, 127
    %v177 = vadd.s32 %v176, 640
    %vm178 = vcmp.lt.s32.totalorder %v177, 784
    %v179 = vsel %vm178, %v173, %v12
    %s180 = scalar_lea.vmem [#allocation11], 20
    %v181 = vpack.c.bf16 0.0, %v179
    %183 = vst [vmem:[%s180] sm:$0xf] %v181
    %s184 = scalar_lea.vmem %s4, 24
    %s186 = sor.u32 255, 127
    %s187 = sand.u32 %s186, 85
    %s188 = sshrl.u32 %s187, 1
    %s189 = sor.u32 %s187, %s188
    %s190 = sand.u32 51, %s189
    %s191 = sshrl.u32 %s190, 2
    %s192 = sor.u32 %s190, %s191
    %s193 = sand.u32 15, %s192
    %v194 = vld [vmem:[%s184] sm:%s193]
    %v195 = vunpack.c.l.bf16 %v194
    %v196 = vunpack.c.h.bf16 %v194
    %v197 = vlaneseq
    %v198 = vand.u32 %v197, 127
    %v199 = vadd.s32 %v198, 768
    %vm200 = vcmp.lt.s32.totalorder %v199, 784
    %v201 = vsel %vm200, %v195, %v12
    %s202 = scalar_lea.vmem [#allocation11], 24
    %v203 = vpack.c.bf16 0.0, %v201
    %205 = vst [vmem:[%s202] sm:$0xf] %v203
    %s206 = scalar_lea.vmem [#allocation11], 28
    %v207 = vpack.c.bf16 0.0, %v12
    %209 = vst [vmem:[%s206] sm:$0xf] %v207
    %s210 = scalar_lea.vmem [#allocation11], 32
    %v211 = vpack.c.bf16 0.0, %v12
    %213 = vst [vmem:[%s210] sm:$0xf] %v211
    %s214 = scalar_lea.vmem [#allocation11], 36
    %v215 = vpack.c.bf16 0.0, %v12
    %217 = vst [vmem:[%s214] sm:$0xf] %v215
    %s218 = scalar_lea.vmem [#allocation11], 40
    %v219 = vpack.c.bf16 0.0, %v12
    %221 = vst [vmem:[%s218] sm:$0xf] %v219
    %s222 = scalar_lea.vmem [#allocation11], 44
    %v223 = vpack.c.bf16 0.0, %v12
    %225 = vst [vmem:[%s222] sm:$0xf] %v223
    %s226 = scalar_lea.vmem [#allocation11], 48
    %v227 = vpack.c.bf16 0.0, %v12
    %229 = vst [vmem:[%s226] sm:$0xf] %v227
    %s230 = scalar_lea.vmem [#allocation11], 52
    %v231 = vpack.c.bf16 0.0, %v12
    %233 = vst [vmem:[%s230] sm:$0xf] %v231
    %v235 = vld [vmem:[#allocation11] sm:$0xff]
    %v236 = vld [vmem:[#allocation11 + $0x8] sm:$0xff]
    %v237 = vld [vmem:[#allocation11 + $0x10] sm:$0xff]
    %v238 = vld [vmem:[#allocation11 + $0x18] sm:$0xf]
    %v239 = vld [vmem:[#allocation11 + $0x1c] sm:$0xff]
    %v240 = vld [vmem:[#allocation11 + $0x24] sm:$0xff]
    %v241 = vld [vmem:[#allocation11 + $0x2c] sm:$0xff]
    %v242 = vld [vmem:[#allocation11 + $0x34] sm:$0xf]
    %v243 = vld [vmem:[#allocation7] sm:$0xff]
    %v244 = vld [vmem:[#allocation7 + $0x8] sm:$0xff]
    %v245 = vld [vmem:[#allocation7 + $0x10] sm:$0xff]
    %v246 = vld [vmem:[#allocation7 + $0x18] sm:$0xff]
    %v247 = vld [vmem:[#allocation7 + $0x20] sm:$0xff]
    %v248 = vld [vmem:[#allocation7 + $0x28] sm:$0xff]
    %v249 = vld [vmem:[#allocation7 + $0x30] sm:$0xff]
    %v250 = vld [vmem:[#allocation7 + $0x38] sm:$0xff]
    %v251 = vld [vmem:[#allocation7 + $0x40] sm:$0xff]
    %v252 = vld [vmem:[#allocation7 + $0x48] sm:$0xff]
    %v253 = vld [vmem:[#allocation7 + $0x50] sm:$0xff]
    %v254 = vld [vmem:[#allocation7 + $0x58] sm:$0xff]
    %v255 = vld [vmem:[#allocation7 + $0x60] sm:$0xff]
    %v256 = vld [vmem:[#allocation7 + $0x68] sm:$0xff]
    %v257 = vld [vmem:[#allocation7 + $0x70] sm:$0xff]
    %v258 = vld [vmem:[#allocation7 + $0x78] sm:$0xff]
    %v259 = vld [vmem:[#allocation7 + $0x80] sm:$0xff]
    %v260 = vld [vmem:[#allocation7 + $0x88] sm:$0xff]
    %v261 = vld [vmem:[#allocation7 + $0x90] sm:$0xff]
    %v262 = vld [vmem:[#allocation7 + $0x98] sm:$0xff]
    %v263 = vld [vmem:[#allocation7 + $0xa0] sm:$0xff]
    %v264 = vld [vmem:[#allocation7 + $0xa8] sm:$0xff]
    %v265 = vld [vmem:[#allocation7 + $0xb0] sm:$0xff]
    %v266 = vld [vmem:[#allocation7 + $0xb8] sm:$0xff]
    %v267 = vld [vmem:[#allocation7 + $0xc0] sm:$0xff]
    %v268 = vld [vmem:[#allocation7 + $0xc8] sm:$0xff]
    %v269 = vld [vmem:[#allocation7 + $0xd0] sm:$0xff]
    %v270 = vld [vmem:[#allocation7 + $0xd8] sm:$0xff]
    %v271 = vld [vmem:[#allocation7 + $0xe0] sm:$0xff]
    %v272 = vld [vmem:[#allocation7 + $0xe8] sm:$0xff]
    %v273 = vld [vmem:[#allocation7 + $0xf0] sm:$0xff]
    %v274 = vld [vmem:[#allocation7 + $0xf8] sm:$0xff]
    %v275 = vld [vmem:[#allocation7 + $0x100] sm:$0xff]
    %v276 = vld [vmem:[#allocation7 + $0x108] sm:$0xff]
    %v277 = vld [vmem:[#allocation7 + $0x110] sm:$0xff]
    %v278 = vld [vmem:[#allocation7 + $0x118] sm:$0xff]
    %v279 = vld [vmem:[#allocation7 + $0x120] sm:$0xff]
    %v280 = vld [vmem:[#allocation7 + $0x128] sm:$0xff]
    %v281 = vld [vmem:[#allocation7 + $0x130] sm:$0xff]
    %v282 = vld [vmem:[#allocation7 + $0x138] sm:$0xff]
    %v283 = vld [vmem:[#allocation7 + $0x140] sm:$0xff]
    %v284 = vld [vmem:[#allocation7 + $0x148] sm:$0xff]
    %v285 = vld [vmem:[#allocation7 + $0x150] sm:$0xff]
    %v286 = vld [vmem:[#allocation7 + $0x158] sm:$0xff]
    %v287 = vld [vmem:[#allocation7 + $0x160] sm:$0xff]
    %v288 = vld [vmem:[#allocation7 + $0x168] sm:$0xff]
    %v289 = vld [vmem:[#allocation7 + $0x170] sm:$0xff]
    %v290 = vld [vmem:[#allocation7 + $0x178] sm:$0xff]
    %v291 = vld [vmem:[#allocation7 + $0x180] sm:$0xff]
    %v292 = vld [vmem:[#allocation7 + $0x188] sm:$0xff]
    %v293 = vld [vmem:[#allocation7 + $0x190] sm:$0xff]
    %v294 = vld [vmem:[#allocation7 + $0x198] sm:$0xff]
    %v295 = vld [vmem:[#allocation7 + $0x1a0] sm:$0xff]
    %v296 = vld [vmem:[#allocation7 + $0x1a8] sm:$0xff]
    %v297 = vld [vmem:[#allocation7 + $0x1b0] sm:$0xff]
    %v298 = vld [vmem:[#allocation7 + $0x1b8] sm:$0xff]
    %v299 = vld [vmem:[#allocation7 + $0x1c0] sm:$0xff]
    %v300 = vld [vmem:[#allocation7 + $0x1c8] sm:$0xff]
    %v301 = vld [vmem:[#allocation7 + $0x1d0] sm:$0xff]
    %v302 = vld [vmem:[#allocation7 + $0x1d8] sm:$0xff]
    %v303 = vld [vmem:[#allocation7 + $0x1e0] sm:$0xff]
    %v304 = vld [vmem:[#allocation7 + $0x1e8] sm:$0xff]
    %v305 = vld [vmem:[#allocation7 + $0x1f0] sm:$0xff]
    %v306 = vld [vmem:[#allocation7 + $0x1f8] sm:$0xff]
    %v307 = vld [vmem:[#allocation7 + $0x200] sm:$0xff]
    %v308 = vld [vmem:[#allocation7 + $0x208] sm:$0xff]
    %v309 = vld [vmem:[#allocation7 + $0x210] sm:$0xff]
    %v310 = vld [vmem:[#allocation7 + $0x218] sm:$0xff]
    %v311 = vld [vmem:[#allocation7 + $0x220] sm:$0xff]
    %v312 = vld [vmem:[#allocation7 + $0x228] sm:$0xff]
    %v313 = vld [vmem:[#allocation7 + $0x230] sm:$0xff]
    %v314 = vld [vmem:[#allocation7 + $0x238] sm:$0xff]
    %v315 = vld [vmem:[#allocation7 + $0x240] sm:$0xff]
    %v316 = vld [vmem:[#allocation7 + $0x248] sm:$0xff]
    %v317 = vld [vmem:[#allocation7 + $0x250] sm:$0xff]
    %v318 = vld [vmem:[#allocation7 + $0x258] sm:$0xff]
    %v319 = vld [vmem:[#allocation7 + $0x260] sm:$0xff]
    %v320 = vld [vmem:[#allocation7 + $0x268] sm:$0xff]
    %v321 = vld [vmem:[#allocation7 + $0x270] sm:$0xff]
    %v322 = vld [vmem:[#allocation7 + $0x278] sm:$0xff]
    %v323 = vld [vmem:[#allocation7 + $0x280] sm:$0xff]
    %v324 = vld [vmem:[#allocation7 + $0x288] sm:$0xff]
    %v325 = vld [vmem:[#allocation7 + $0x290] sm:$0xff]
    %v326 = vld [vmem:[#allocation7 + $0x298] sm:$0xff]
    %v327 = vld [vmem:[#allocation7 + $0x2a0] sm:$0xff]
    %v328 = vld [vmem:[#allocation7 + $0x2a8] sm:$0xff]
    %v329 = vld [vmem:[#allocation7 + $0x2b0] sm:$0xff]
    %v330 = vld [vmem:[#allocation7 + $0x2b8] sm:$0xff]
    %v331 = vld [vmem:[#allocation7 + $0x2c0] sm:$0xff]
    %v332 = vld [vmem:[#allocation7 + $0x2c8] sm:$0xff]
    %v333 = vld [vmem:[#allocation7 + $0x2d0] sm:$0xff]
    %v334 = vld [vmem:[#allocation7 + $0x2d8] sm:$0xff]
    %v335 = vld [vmem:[#allocation7 + $0x2e0] sm:$0xff]
    %v336 = vld [vmem:[#allocation7 + $0x2e8] sm:$0xff]
    %v337 = vld [vmem:[#allocation7 + $0x2f0] sm:$0xff]
    %v338 = vld [vmem:[#allocation7 + $0x2f8] sm:$0xff]
    %v339 = vld [vmem:[#allocation7 + $0x300] sm:$0xff]
    %v340 = vld [vmem:[#allocation7 + $0x308] sm:$0xff]
    %v341 = vld [vmem:[#allocation7 + $0x310] sm:$0xff]
    %v342 = vld [vmem:[#allocation7 + $0x318] sm:$0xff]
    %v343 = vld [vmem:[#allocation7 + $0x320] sm:$0xff]
    %v344 = vld [vmem:[#allocation7 + $0x328] sm:$0xff]
    %v345 = vld [vmem:[#allocation7 + $0x330] sm:$0xff]
    %v346 = vld [vmem:[#allocation7 + $0x338] sm:$0xff]
    %v347 = vld [vmem:[#allocation7 + $0x340] sm:$0xff]
    %v348 = vld [vmem:[#allocation7 + $0x348] sm:$0xff]
    %v349 = vld [vmem:[#allocation7 + $0x350] sm:$0xff]
    %v350 = vld [vmem:[#allocation7 + $0x358] sm:$0xff]
    %v351 = vld [vmem:[#allocation7 + $0x360] sm:$0xff]
    %v352 = vld [vmem:[#allocation7 + $0x368] sm:$0xff]
    %v353 = vld [vmem:[#allocation7 + $0x370] sm:$0xff]
    %v354 = vld [vmem:[#allocation7 + $0x378] sm:$0xff]
    %v355 = vld [vmem:[#allocation7 + $0x380] sm:$0xff]
    %v356 = vld [vmem:[#allocation7 + $0x388] sm:$0xff]
    %v357 = vld [vmem:[#allocation7 + $0x390] sm:$0xff]
    %v358 = vld [vmem:[#allocation7 + $0x398] sm:$0xff]
    %v359 = vld [vmem:[#allocation7 + $0x3a0] sm:$0xff]
    %v360 = vld [vmem:[#allocation7 + $0x3a8] sm:$0xff]
    %v361 = vld [vmem:[#allocation7 + $0x3b0] sm:$0xff]
    %v362 = vld [vmem:[#allocation7 + $0x3b8] sm:$0xff]
    %v363 = vld [vmem:[#allocation7 + $0x3c0] sm:$0xff]
    %v364 = vld [vmem:[#allocation7 + $0x3c8] sm:$0xff]
    %v365 = vld [vmem:[#allocation7 + $0x3d0] sm:$0xff]
    %v366 = vld [vmem:[#allocation7 + $0x3d8] sm:$0xff]
    %v367 = vld [vmem:[#allocation7 + $0x3e0] sm:$0xff]
    %v368 = vld [vmem:[#allocation7 + $0x3e8] sm:$0xff]
    %v369 = vld [vmem:[#allocation7 + $0x3f0] sm:$0xff]
    %v370 = vld [vmem:[#allocation7 + $0x3f8] sm:$0xff]
    %v371 = vld [vmem:[#allocation7 + $0x400] sm:$0xff]
    %v372 = vld [vmem:[#allocation7 + $0x408] sm:$0xff]
    %v373 = vld [vmem:[#allocation7 + $0x410] sm:$0xff]
    %v374 = vld [vmem:[#allocation7 + $0x418] sm:$0xff]
    %v375 = vld [vmem:[#allocation7 + $0x420] sm:$0xff]
    %v376 = vld [vmem:[#allocation7 + $0x428] sm:$0xff]
    %v377 = vld [vmem:[#allocation7 + $0x430] sm:$0xff]
    %v378 = vld [vmem:[#allocation7 + $0x438] sm:$0xff]
    %v379 = vld [vmem:[#allocation7 + $0x440] sm:$0xff]
    %v380 = vld [vmem:[#allocation7 + $0x448] sm:$0xff]
    %v381 = vld [vmem:[#allocation7 + $0x450] sm:$0xff]
    %v382 = vld [vmem:[#allocation7 + $0x458] sm:$0xff]
    %v383 = vld [vmem:[#allocation7 + $0x460] sm:$0xff]
    %v384 = vld [vmem:[#allocation7 + $0x468] sm:$0xff]
    %v385 = vld [vmem:[#allocation7 + $0x470] sm:$0xff]
    %v386 = vld [vmem:[#allocation7 + $0x478] sm:$0xff]
    %v387 = vld [vmem:[#allocation7 + $0x480] sm:$0xff]
    %v388 = vld [vmem:[#allocation7 + $0x488] sm:$0xff]
    %v389 = vld [vmem:[#allocation7 + $0x490] sm:$0xff]
    %v390 = vld [vmem:[#allocation7 + $0x498] sm:$0xff]
    %v391 = vld [vmem:[#allocation7 + $0x4a0] sm:$0xff]
    %v392 = vld [vmem:[#allocation7 + $0x4a8] sm:$0xff]
    %v393 = vld [vmem:[#allocation7 + $0x4b0] sm:$0xff]
    %v394 = vld [vmem:[#allocation7 + $0x4b8] sm:$0xff]
    %v395 = vld [vmem:[#allocation7 + $0x4c0] sm:$0xff]
    %v396 = vld [vmem:[#allocation7 + $0x4c8] sm:$0xff]
    %v397 = vld [vmem:[#allocation7 + $0x4d0] sm:$0xff]
    %v398 = vld [vmem:[#allocation7 + $0x4d8] sm:$0xff]
    %v399 = vld [vmem:[#allocation7 + $0x4e0] sm:$0xff]
    %v400 = vld [vmem:[#allocation7 + $0x4e8] sm:$0xff]
    %v401 = vld [vmem:[#allocation7 + $0x4f0] sm:$0xff]
    %v402 = vld [vmem:[#allocation7 + $0x4f8] sm:$0xff]
    %v403 = vld [vmem:[#allocation7 + $0x500] sm:$0xff]
    %v404 = vld [vmem:[#allocation7 + $0x508] sm:$0xff]
    %v405 = vld [vmem:[#allocation7 + $0x510] sm:$0xff]
    %v406 = vld [vmem:[#allocation7 + $0x518] sm:$0xff]
    %v407 = vld [vmem:[#allocation7 + $0x520] sm:$0xff]
    %v408 = vld [vmem:[#allocation7 + $0x528] sm:$0xff]
    %v409 = vld [vmem:[#allocation7 + $0x530] sm:$0xff]
    %v410 = vld [vmem:[#allocation7 + $0x538] sm:$0xff]
    %v411 = vld [vmem:[#allocation7 + $0x540] sm:$0xff]
    %v412 = vld [vmem:[#allocation7 + $0x548] sm:$0xff]
    %v413 = vld [vmem:[#allocation7 + $0x550] sm:$0xff]
    %v414 = vld [vmem:[#allocation7 + $0x558] sm:$0xff]
    %v415 = vld [vmem:[#allocation7 + $0x560] sm:$0xff]
    %v416 = vld [vmem:[#allocation7 + $0x568] sm:$0xff]
    %v417 = vld [vmem:[#allocation7 + $0x570] sm:$0xff]
    %v418 = vld [vmem:[#allocation7 + $0x578] sm:$0xff]
    %v419 = vld [vmem:[#allocation7 + $0x580] sm:$0xff]
    %v420 = vld [vmem:[#allocation7 + $0x588] sm:$0xff]
    %v421 = vld [vmem:[#allocation7 + $0x590] sm:$0xff]
    %v422 = vld [vmem:[#allocation7 + $0x598] sm:$0xff]
    %v423 = vld [vmem:[#allocation7 + $0x5a0] sm:$0xff]
    %v424 = vld [vmem:[#allocation7 + $0x5a8] sm:$0xff]
    %v425 = vld [vmem:[#allocation7 + $0x5b0] sm:$0xff]
    %v426 = vld [vmem:[#allocation7 + $0x5b8] sm:$0xff]
    %v427 = vld [vmem:[#allocation7 + $0x5c0] sm:$0xff]
    %v428 = vld [vmem:[#allocation7 + $0x5c8] sm:$0xff]
    %v429 = vld [vmem:[#allocation7 + $0x5d0] sm:$0xff]
    %v430 = vld [vmem:[#allocation7 + $0x5d8] sm:$0xff]
    %v431 = vld [vmem:[#allocation7 + $0x5e0] sm:$0xff]
    %v432 = vld [vmem:[#allocation7 + $0x5e8] sm:$0xff]
    %v433 = vld [vmem:[#allocation7 + $0x5f0] sm:$0xff]
    %v434 = vld [vmem:[#allocation7 + $0x5f8] sm:$0xff]
    %v435 = vld [vmem:[#allocation7 + $0x600] sm:$0xff]
    %v436 = vld [vmem:[#allocation7 + $0x608] sm:$0xff]
    %v437 = vld [vmem:[#allocation7 + $0x610] sm:$0xff]
    %v438 = vld [vmem:[#allocation7 + $0x618] sm:$0xff]
    %v439 = vld [vmem:[%s1] sm:$0xf]
    %v441 = vlaneseq
    %v442 = vshrl.u32 %v441, 7
    %v443 = vsub.s32 0, %v442
    %v444 = vrot.slane %v439, %v443
    %v445 = vlaneseq
    %v446 = vshrl.u32 %v445, 7
    %v447 = vsub.s32 1, %v446
    %v448 = vrot.slane %v439, %v447
    %v449 = vlaneseq
    %v450 = vshrl.u32 %v449, 7
    %v451 = vsub.s32 2, %v450
    %v452 = vrot.slane %v439, %v451
    %v453 = vlaneseq
    %v454 = vshrl.u32 %v453, 7
    %v455 = vsub.s32 3, %v454
    %v456 = vrot.slane %v439, %v455
    %v469 = vunpack.c.l.b16 %v235
    %v470 = vunpack.c.h.b16 %v235
    %v471 = vunpack.c.l.b16 %v236
    %v472 = vunpack.c.h.b16 %v236
    %v473 = vunpack.c.l.b16 %v237
    %v474 = vunpack.c.h.b16 %v237
    %v475 = vunpack.c.l.b16 %v238
    %v476 = vunpack.c.l.b16 %v239
    %v477 = vunpack.c.h.b16 %v239
    %v478 = vunpack.c.l.b16 %v240
    %v479 = vunpack.c.h.b16 %v240
    %v480 = vunpack.c.l.b16 %v241
    %v481 = vunpack.c.h.b16 %v241
    %v482 = vunpack.c.l.b16 %v242
    %v483 = vpack.c.b16 %v476, %v469
    %v484 = vpack.c.b16 %v477, %v470
    %v485 = vpack.c.b16 %v478, %v471
    %v486 = vpack.c.b16 %v479, %v472
    %v487 = vpack.c.b16 %v480, %v473
    %v488 = vpack.c.b16 %v481, %v474
    %v489 = vpack.c.b16 %v482, %v475
    %v692 = vunpack.c.l.b16 %v243
    %v693 = vunpack.c.h.b16 %v243
    %v694 = vunpack.c.l.b16 %v244
    %v695 = vunpack.c.h.b16 %v244
    %v696 = vunpack.c.l.b16 %v245
    %v697 = vunpack.c.h.b16 %v245
    %v698 = vunpack.c.l.b16 %v246
    %v699 = vunpack.c.h.b16 %v246
    %v700 = vunpack.c.l.b16 %v247
    %v701 = vunpack.c.h.b16 %v247
    %v702 = vunpack.c.l.b16 %v248
    %v703 = vunpack.c.h.b16 %v248
    %v704 = vunpack.c.l.b16 %v249
    %v705 = vunpack.c.h.b16 %v249
    %v706 = vunpack.c.l.b16 %v250
    %v707 = vunpack.c.h.b16 %v250
    %v708 = vunpack.c.l.b16 %v251
    %v709 = vunpack.c.h.b16 %v251
    %v710 = vunpack.c.l.b16 %v252
    %v711 = vunpack.c.h.b16 %v252
    %v712 = vunpack.c.l.b16 %v253
    %v713 = vunpack.c.h.b16 %v253
    %v714 = vunpack.c.l.b16 %v254
    %v715 = vunpack.c.h.b16 %v254
    %v716 = vunpack.c.l.b16 %v255
    %v717 = vunpack.c.h.b16 %v255
    %v718 = vunpack.c.l.b16 %v256
    %v719 = vunpack.c.h.b16 %v256
    %v720 = vunpack.c.l.b16 %v257
    %v721 = vunpack.c.h.b16 %v257
    %v722 = vunpack.c.l.b16 %v258
    %v723 = vunpack.c.h.b16 %v258
    %v724 = vunpack.c.l.b16 %v259
    %v725 = vunpack.c.h.b16 %v259
    %v726 = vunpack.c.l.b16 %v260
    %v727 = vunpack.c.h.b16 %v260
    %v728 = vunpack.c.l.b16 %v261
    %v729 = vunpack.c.h.b16 %v261
    %v730 = vunpack.c.l.b16 %v262
    %v731 = vunpack.c.h.b16 %v262
    %v732 = vunpack.c.l.b16 %v263
    %v733 = vunpack.c.h.b16 %v263
    %v734 = vunpack.c.l.b16 %v264
    %v735 = vunpack.c.h.b16 %v264
    %v736 = vunpack.c.l.b16 %v265
    %v737 = vunpack.c.h.b16 %v265
    %v738 = vunpack.c.l.b16 %v266
    %v739 = vunpack.c.h.b16 %v266
    %v740 = vunpack.c.l.b16 %v267
    %v741 = vunpack.c.h.b16 %v267
    %v742 = vunpack.c.l.b16 %v268
    %v743 = vunpack.c.h.b16 %v268
    %v744 = vunpack.c.l.b16 %v269
    %v745 = vunpack.c.h.b16 %v269
    %v746 = vunpack.c.l.b16 %v270
    %v747 = vunpack.c.h.b16 %v270
    %v748 = vunpack.c.l.b16 %v271
    %v749 = vunpack.c.h.b16 %v271
    %v750 = vunpack.c.l.b16 %v272
    %v751 = vunpack.c.h.b16 %v272
    %v752 = vunpack.c.l.b16 %v273
    %v753 = vunpack.c.h.b16 %v273
    %v754 = vunpack.c.l.b16 %v274
    %v755 = vunpack.c.h.b16 %v274
    %v756 = vunpack.c.l.b16 %v275
    %v757 = vunpack.c.h.b16 %v275
    %v758 = vunpack.c.l.b16 %v276
    %v759 = vunpack.c.h.b16 %v276
    %v760 = vunpack.c.l.b16 %v277
    %v761 = vunpack.c.h.b16 %v277
    %v762 = vunpack.c.l.b16 %v278
    %v763 = vunpack.c.h.b16 %v278
    %v764 = vunpack.c.l.b16 %v279
    %v765 = vunpack.c.h.b16 %v279
    %v766 = vunpack.c.l.b16 %v280
    %v767 = vunpack.c.h.b16 %v280
    %v768 = vunpack.c.l.b16 %v281
    %v769 = vunpack.c.h.b16 %v281
    %v770 = vunpack.c.l.b16 %v282
    %v771 = vunpack.c.h.b16 %v282
    %v772 = vunpack.c.l.b16 %v283
    %v773 = vunpack.c.h.b16 %v283
    %v774 = vunpack.c.l.b16 %v284
    %v775 = vunpack.c.h.b16 %v284
    %v776 = vunpack.c.l.b16 %v285
    %v777 = vunpack.c.h.b16 %v285
    %v778 = vunpack.c.l.b16 %v286
    %v779 = vunpack.c.h.b16 %v286
    %v780 = vunpack.c.l.b16 %v287
    %v781 = vunpack.c.h.b16 %v287
    %v782 = vunpack.c.l.b16 %v288
    %v783 = vunpack.c.h.b16 %v288
    %v784 = vunpack.c.l.b16 %v289
    %v785 = vunpack.c.h.b16 %v289
    %v786 = vunpack.c.l.b16 %v290
    %v787 = vunpack.c.h.b16 %v290
    %v788 = vunpack.c.l.b16 %v291
    %v789 = vunpack.c.h.b16 %v291
    %v790 = vunpack.c.l.b16 %v292
    %v791 = vunpack.c.h.b16 %v292
    %v792 = vunpack.c.l.b16 %v293
    %v793 = vunpack.c.h.b16 %v293
    %v794 = vunpack.c.l.b16 %v294
    %v795 = vunpack.c.h.b16 %v294
    %v796 = vunpack.c.l.b16 %v295
    %v797 = vunpack.c.h.b16 %v295
    %v798 = vunpack.c.l.b16 %v296
    %v799 = vunpack.c.h.b16 %v296
    %v800 = vunpack.c.l.b16 %v297
    %v801 = vunpack.c.h.b16 %v297
    %v802 = vunpack.c.l.b16 %v298
    %v803 = vunpack.c.h.b16 %v298
    %v804 = vunpack.c.l.b16 %v299
    %v805 = vunpack.c.h.b16 %v299
    %v806 = vunpack.c.l.b16 %v300
    %v807 = vunpack.c.h.b16 %v300
    %v808 = vunpack.c.l.b16 %v301
    %v809 = vunpack.c.h.b16 %v301
    %v810 = vunpack.c.l.b16 %v302
    %v811 = vunpack.c.h.b16 %v302
    %v812 = vunpack.c.l.b16 %v303
    %v813 = vunpack.c.h.b16 %v303
    %v814 = vunpack.c.l.b16 %v304
    %v815 = vunpack.c.h.b16 %v304
    %v816 = vunpack.c.l.b16 %v305
    %v817 = vunpack.c.h.b16 %v305
    %v818 = vunpack.c.l.b16 %v306
    %v819 = vunpack.c.h.b16 %v306
    %v820 = vunpack.c.l.b16 %v307
    %v821 = vunpack.c.h.b16 %v307
    %v822 = vunpack.c.l.b16 %v308
    %v823 = vunpack.c.h.b16 %v308
    %v824 = vunpack.c.l.b16 %v309
    %v825 = vunpack.c.h.b16 %v309
    %v826 = vunpack.c.l.b16 %v310
    %v827 = vunpack.c.h.b16 %v310
    %v828 = vunpack.c.l.b16 %v311
    %v829 = vunpack.c.h.b16 %v311
    %v830 = vunpack.c.l.b16 %v312
    %v831 = vunpack.c.h.b16 %v312
    %v832 = vunpack.c.l.b16 %v313
    %v833 = vunpack.c.h.b16 %v313
    %v834 = vunpack.c.l.b16 %v314
    %v835 = vunpack.c.h.b16 %v314
    %v836 = vunpack.c.l.b16 %v315
    %v837 = vunpack.c.h.b16 %v315
    %v838 = vunpack.c.l.b16 %v316
    %v839 = vunpack.c.h.b16 %v316
    %v840 = vunpack.c.l.b16 %v317
    %v841 = vunpack.c.h.b16 %v317
    %v842 = vunpack.c.l.b16 %v318
    %v843 = vunpack.c.h.b16 %v318
    %v844 = vunpack.c.l.b16 %v319
    %v845 = vunpack.c.h.b16 %v319
    %v846 = vunpack.c.l.b16 %v320
    %v847 = vunpack.c.h.b16 %v320
    %v848 = vunpack.c.l.b16 %v321
    %v849 = vunpack.c.h.b16 %v321
    %v850 = vunpack.c.l.b16 %v322
    %v851 = vunpack.c.h.b16 %v322
    %v852 = vunpack.c.l.b16 %v323
    %v853 = vunpack.c.h.b16 %v323
    %v854 = vunpack.c.l.b16 %v324
    %v855 = vunpack.c.h.b16 %v324
    %v856 = vunpack.c.l.b16 %v325
    %v857 = vunpack.c.h.b16 %v325
    %v858 = vunpack.c.l.b16 %v326
    %v859 = vunpack.c.h.b16 %v326
    %v860 = vunpack.c.l.b16 %v327
    %v861 = vunpack.c.h.b16 %v327
    %v862 = vunpack.c.l.b16 %v328
    %v863 = vunpack.c.h.b16 %v328
    %v864 = vunpack.c.l.b16 %v329
    %v865 = vunpack.c.h.b16 %v329
    %v866 = vunpack.c.l.b16 %v330
    %v867 = vunpack.c.h.b16 %v330
    %v868 = vunpack.c.l.b16 %v331
    %v869 = vunpack.c.h.b16 %v331
    %v870 = vunpack.c.l.b16 %v332
    %v871 = vunpack.c.h.b16 %v332
    %v872 = vunpack.c.l.b16 %v333
    %v873 = vunpack.c.h.b16 %v333
    %v874 = vunpack.c.l.b16 %v334
    %v875 = vunpack.c.h.b16 %v334
    %v876 = vunpack.c.l.b16 %v335
    %v877 = vunpack.c.h.b16 %v335
    %v878 = vunpack.c.l.b16 %v336
    %v879 = vunpack.c.h.b16 %v336
    %v880 = vunpack.c.l.b16 %v337
    %v881 = vunpack.c.h.b16 %v337
    %v882 = vunpack.c.l.b16 %v338
    %v883 = vunpack.c.h.b16 %v338
    %v884 = vunpack.c.l.b16 %v339
    %v885 = vunpack.c.h.b16 %v339
    %v886 = vunpack.c.l.b16 %v340
    %v887 = vunpack.c.h.b16 %v340
    %v888 = vunpack.c.l.b16 %v341
    %v889 = vunpack.c.h.b16 %v341
    %v890 = vunpack.c.l.b16 %v342
    %v891 = vunpack.c.h.b16 %v342
    %v892 = vunpack.c.l.b16 %v343
    %v893 = vunpack.c.h.b16 %v343
    %v894 = vunpack.c.l.b16 %v344
    %v895 = vunpack.c.h.b16 %v344
    %v896 = vunpack.c.l.b16 %v345
    %v897 = vunpack.c.h.b16 %v345
    %v898 = vunpack.c.l.b16 %v346
    %v899 = vunpack.c.h.b16 %v346
    %v900 = vunpack.c.l.b16 %v347
    %v901 = vunpack.c.h.b16 %v347
    %v902 = vunpack.c.l.b16 %v348
    %v903 = vunpack.c.h.b16 %v348
    %v904 = vunpack.c.l.b16 %v349
    %v905 = vunpack.c.h.b16 %v349
    %v906 = vunpack.c.l.b16 %v350
    %v907 = vunpack.c.h.b16 %v350
    %v908 = vunpack.c.l.b16 %v351
    %v909 = vunpack.c.h.b16 %v351
    %v910 = vunpack.c.l.b16 %v352
    %v911 = vunpack.c.h.b16 %v352
    %v912 = vunpack.c.l.b16 %v353
    %v913 = vunpack.c.h.b16 %v353
    %v914 = vunpack.c.l.b16 %v354
    %v915 = vunpack.c.h.b16 %v354
    %v916 = vunpack.c.l.b16 %v355
    %v917 = vunpack.c.h.b16 %v355
    %v918 = vunpack.c.l.b16 %v356
    %v919 = vunpack.c.h.b16 %v356
    %v920 = vunpack.c.l.b16 %v357
    %v921 = vunpack.c.h.b16 %v357
    %v922 = vunpack.c.l.b16 %v358
    %v923 = vunpack.c.h.b16 %v358
    %v924 = vunpack.c.l.b16 %v359
    %v925 = vunpack.c.h.b16 %v359
    %v926 = vunpack.c.l.b16 %v360
    %v927 = vunpack.c.h.b16 %v360
    %v928 = vunpack.c.l.b16 %v361
    %v929 = vunpack.c.h.b16 %v361
    %v930 = vunpack.c.l.b16 %v362
    %v931 = vunpack.c.h.b16 %v362
    %v932 = vunpack.c.l.b16 %v363
    %v933 = vunpack.c.h.b16 %v363
    %v934 = vunpack.c.l.b16 %v364
    %v935 = vunpack.c.h.b16 %v364
    %v936 = vunpack.c.l.b16 %v365
    %v937 = vunpack.c.h.b16 %v365
    %v938 = vunpack.c.l.b16 %v366
    %v939 = vunpack.c.h.b16 %v366
    %v940 = vunpack.c.l.b16 %v367
    %v941 = vunpack.c.h.b16 %v367
    %v942 = vunpack.c.l.b16 %v368
    %v943 = vunpack.c.h.b16 %v368
    %v944 = vunpack.c.l.b16 %v369
    %v945 = vunpack.c.h.b16 %v369
    %v946 = vunpack.c.l.b16 %v370
    %v947 = vunpack.c.h.b16 %v370
    %v948 = vunpack.c.l.b16 %v371
    %v949 = vunpack.c.h.b16 %v371
    %v950 = vunpack.c.l.b16 %v372
    %v951 = vunpack.c.h.b16 %v372
    %v952 = vunpack.c.l.b16 %v373
    %v953 = vunpack.c.h.b16 %v373
    %v954 = vunpack.c.l.b16 %v374
    %v955 = vunpack.c.h.b16 %v374
    %v956 = vunpack.c.l.b16 %v375
    %v957 = vunpack.c.h.b16 %v375
    %v958 = vunpack.c.l.b16 %v376
    %v959 = vunpack.c.h.b16 %v376
    %v960 = vunpack.c.l.b16 %v377
    %v961 = vunpack.c.h.b16 %v377
    %v962 = vunpack.c.l.b16 %v378
    %v963 = vunpack.c.h.b16 %v378
    %v964 = vunpack.c.l.b16 %v379
    %v965 = vunpack.c.h.b16 %v379
    %v966 = vunpack.c.l.b16 %v380
    %v967 = vunpack.c.h.b16 %v380
    %v968 = vunpack.c.l.b16 %v381
    %v969 = vunpack.c.h.b16 %v381
    %v970 = vunpack.c.l.b16 %v382
    %v971 = vunpack.c.h.b16 %v382
    %v972 = vunpack.c.l.b16 %v383
    %v973 = vunpack.c.h.b16 %v383
    %v974 = vunpack.c.l.b16 %v384
    %v975 = vunpack.c.h.b16 %v384
    %v976 = vunpack.c.l.b16 %v385
    %v977 = vunpack.c.h.b16 %v385
    %v978 = vunpack.c.l.b16 %v386
    %v979 = vunpack.c.h.b16 %v386
    %v980 = vunpack.c.l.b16 %v387
    %v981 = vunpack.c.h.b16 %v387
    %v982 = vunpack.c.l.b16 %v388
    %v983 = vunpack.c.h.b16 %v388
    %v984 = vunpack.c.l.b16 %v389
    %v985 = vunpack.c.h.b16 %v389
    %v986 = vunpack.c.l.b16 %v390
    %v987 = vunpack.c.h.b16 %v390
    %v988 = vunpack.c.l.b16 %v391
    %v989 = vunpack.c.h.b16 %v391
    %v990 = vunpack.c.l.b16 %v392
    %v991 = vunpack.c.h.b16 %v392
    %v992 = vunpack.c.l.b16 %v393
    %v993 = vunpack.c.h.b16 %v393
    %v994 = vunpack.c.l.b16 %v394
    %v995 = vunpack.c.h.b16 %v394
    %v996 = vunpack.c.l.b16 %v395
    %v997 = vunpack.c.h.b16 %v395
    %v998 = vunpack.c.l.b16 %v396
    %v999 = vunpack.c.h.b16 %v396
    %v1000 = vunpack.c.l.b16 %v397
    %v1001 = vunpack.c.h.b16 %v397
    %v1002 = vunpack.c.l.b16 %v398
    %v1003 = vunpack.c.h.b16 %v398
    %v1004 = vunpack.c.l.b16 %v399
    %v1005 = vunpack.c.h.b16 %v399
    %v1006 = vunpack.c.l.b16 %v400
    %v1007 = vunpack.c.h.b16 %v400
    %v1008 = vunpack.c.l.b16 %v401
    %v1009 = vunpack.c.h.b16 %v401
    %v1010 = vunpack.c.l.b16 %v402
    %v1011 = vunpack.c.h.b16 %v402
    %v1012 = vunpack.c.l.b16 %v403
    %v1013 = vunpack.c.h.b16 %v403
    %v1014 = vunpack.c.l.b16 %v404
    %v1015 = vunpack.c.h.b16 %v404
    %v1016 = vunpack.c.l.b16 %v405
    %v1017 = vunpack.c.h.b16 %v405
    %v1018 = vunpack.c.l.b16 %v406
    %v1019 = vunpack.c.h.b16 %v406
    %v1020 = vunpack.c.l.b16 %v407
    %v1021 = vunpack.c.h.b16 %v407
    %v1022 = vunpack.c.l.b16 %v408
    %v1023 = vunpack.c.h.b16 %v408
    %v1024 = vunpack.c.l.b16 %v409
    %v1025 = vunpack.c.h.b16 %v409
    %v1026 = vunpack.c.l.b16 %v410
    %v1027 = vunpack.c.h.b16 %v410
    %v1028 = vunpack.c.l.b16 %v411
    %v1029 = vunpack.c.h.b16 %v411
    %v1030 = vunpack.c.l.b16 %v412
    %v1031 = vunpack.c.h.b16 %v412
    %v1032 = vunpack.c.l.b16 %v413
    %v1033 = vunpack.c.h.b16 %v413
    %v1034 = vunpack.c.l.b16 %v414
    %v1035 = vunpack.c.h.b16 %v414
    %v1036 = vunpack.c.l.b16 %v415
    %v1037 = vunpack.c.h.b16 %v415
    %v1038 = vunpack.c.l.b16 %v416
    %v1039 = vunpack.c.h.b16 %v416
    %v1040 = vunpack.c.l.b16 %v417
    %v1041 = vunpack.c.h.b16 %v417
    %v1042 = vunpack.c.l.b16 %v418
    %v1043 = vunpack.c.h.b16 %v418
    %v1044 = vunpack.c.l.b16 %v419
    %v1045 = vunpack.c.h.b16 %v419
    %v1046 = vunpack.c.l.b16 %v420
    %v1047 = vunpack.c.h.b16 %v420
    %v1048 = vunpack.c.l.b16 %v421
    %v1049 = vunpack.c.h.b16 %v421
    %v1050 = vunpack.c.l.b16 %v422
    %v1051 = vunpack.c.h.b16 %v422
    %v1052 = vunpack.c.l.b16 %v423
    %v1053 = vunpack.c.h.b16 %v423
    %v1054 = vunpack.c.l.b16 %v424
    %v1055 = vunpack.c.h.b16 %v424
    %v1056 = vunpack.c.l.b16 %v425
    %v1057 = vunpack.c.h.b16 %v425
    %v1058 = vunpack.c.l.b16 %v426
    %v1059 = vunpack.c.h.b16 %v426
    %v1060 = vunpack.c.l.b16 %v427
    %v1061 = vunpack.c.h.b16 %v427
    %v1062 = vunpack.c.l.b16 %v428
    %v1063 = vunpack.c.h.b16 %v428
    %v1064 = vunpack.c.l.b16 %v429
    %v1065 = vunpack.c.h.b16 %v429
    %v1066 = vunpack.c.l.b16 %v430
    %v1067 = vunpack.c.h.b16 %v430
    %v1068 = vunpack.c.l.b16 %v431
    %v1069 = vunpack.c.h.b16 %v431
    %v1070 = vunpack.c.l.b16 %v432
    %v1071 = vunpack.c.h.b16 %v432
    %v1072 = vunpack.c.l.b16 %v433
    %v1073 = vunpack.c.h.b16 %v433
    %v1074 = vunpack.c.l.b16 %v434
    %v1075 = vunpack.c.h.b16 %v434
    %v1076 = vunpack.c.l.b16 %v435
    %v1077 = vunpack.c.h.b16 %v435
    %v1078 = vunpack.c.l.b16 %v436
    %v1079 = vunpack.c.h.b16 %v436
    %v1080 = vunpack.c.l.b16 %v437
    %v1081 = vunpack.c.h.b16 %v437
    %v1082 = vunpack.c.l.b16 %v438
    %v1083 = vunpack.c.h.b16 %v438
    %v1084 = vpack.c.b16 %v696, %v692
    %v1085 = vpack.c.b16 %v697, %v693
    %v1086 = vpack.c.b16 %v698, %v694
    %v1087 = vpack.c.b16 %v699, %v695
    %v1088 = vpack.c.b16 %v704, %v700
    %v1089 = vpack.c.b16 %v705, %v701
    %v1090 = vpack.c.b16 %v706, %v702
    %v1091 = vpack.c.b16 %v707, %v703
    %v1092 = vpack.c.b16 %v712, %v708
    %v1093 = vpack.c.b16 %v713, %v709
    %v1094 = vpack.c.b16 %v714, %v710
    %v1095 = vpack.c.b16 %v715, %v711
    %v1096 = vpack.c.b16 %v720, %v716
    %v1097 = vpack.c.b16 %v721, %v717
    %v1098 = vpack.c.b16 %v722, %v718
    %v1099 = vpack.c.b16 %v723, %v719
    %v1100 = vpack.c.b16 %v728, %v724
    %v1101 = vpack.c.b16 %v729, %v725
    %v1102 = vpack.c.b16 %v730, %v726
    %v1103 = vpack.c.b16 %v731, %v727
    %v1104 = vpack.c.b16 %v736, %v732
    %v1105 = vpack.c.b16 %v737, %v733
    %v1106 = vpack.c.b16 %v738, %v734
    %v1107 = vpack.c.b16 %v739, %v735
    %v1108 = vpack.c.b16 %v744, %v740
    %v1109 = vpack.c.b16 %v745, %v741
    %v1110 = vpack.c.b16 %v746, %v742
    %v1111 = vpack.c.b16 %v747, %v743
    %v1112 = vpack.c.b16 %v752, %v748
    %v1113 = vpack.c.b16 %v753, %v749
    %v1114 = vpack.c.b16 %v754, %v750
    %v1115 = vpack.c.b16 %v755, %v751
    %v1116 = vpack.c.b16 %v760, %v756
    %v1117 = vpack.c.b16 %v761, %v757
    %v1118 = vpack.c.b16 %v762, %v758
    %v1119 = vpack.c.b16 %v763, %v759
    %v1120 = vpack.c.b16 %v768, %v764
    %v1121 = vpack.c.b16 %v769, %v765
    %v1122 = vpack.c.b16 %v770, %v766
    %v1123 = vpack.c.b16 %v771, %v767
    %v1124 = vpack.c.b16 %v776, %v772
    %v1125 = vpack.c.b16 %v777, %v773
    %v1126 = vpack.c.b16 %v778, %v774
    %v1127 = vpack.c.b16 %v779, %v775
    %v1128 = vpack.c.b16 %v784, %v780
    %v1129 = vpack.c.b16 %v785, %v781
    %v1130 = vpack.c.b16 %v786, %v782
    %v1131 = vpack.c.b16 %v787, %v783
    %v1132 = vpack.c.b16 %v792, %v788
    %v1133 = vpack.c.b16 %v793, %v789
    %v1134 = vpack.c.b16 %v794, %v790
    %v1135 = vpack.c.b16 %v795, %v791
    %v1136 = vpack.c.b16 %v800, %v796
    %v1137 = vpack.c.b16 %v801, %v797
    %v1138 = vpack.c.b16 %v802, %v798
    %v1139 = vpack.c.b16 %v803, %v799
    %v1140 = vpack.c.b16 %v808, %v804
    %v1141 = vpack.c.b16 %v809, %v805
    %v1142 = vpack.c.b16 %v810, %v806
    %v1143 = vpack.c.b16 %v811, %v807
    %v1144 = vpack.c.b16 %v816, %v812
    %v1145 = vpack.c.b16 %v817, %v813
    %v1146 = vpack.c.b16 %v818, %v814
    %v1147 = vpack.c.b16 %v819, %v815
    %v1148 = vpack.c.b16 %v824, %v820
    %v1149 = vpack.c.b16 %v825, %v821
    %v1150 = vpack.c.b16 %v826, %v822
    %v1151 = vpack.c.b16 %v827, %v823
    %v1152 = vpack.c.b16 %v832, %v828
    %v1153 = vpack.c.b16 %v833, %v829
    %v1154 = vpack.c.b16 %v834, %v830
    %v1155 = vpack.c.b16 %v835, %v831
    %v1156 = vpack.c.b16 %v840, %v836
    %v1157 = vpack.c.b16 %v841, %v837
    %v1158 = vpack.c.b16 %v842, %v838
    %v1159 = vpack.c.b16 %v843, %v839
    %v1160 = vpack.c.b16 %v848, %v844
    %v1161 = vpack.c.b16 %v849, %v845
    %v1162 = vpack.c.b16 %v850, %v846
    %v1163 = vpack.c.b16 %v851, %v847
    %v1164 = vpack.c.b16 %v856, %v852
    %v1165 = vpack.c.b16 %v857, %v853
    %v1166 = vpack.c.b16 %v858, %v854
    %v1167 = vpack.c.b16 %v859, %v855
    %v1168 = vpack.c.b16 %v864, %v860
    %v1169 = vpack.c.b16 %v865, %v861
    %v1170 = vpack.c.b16 %v866, %v862
    %v1171 = vpack.c.b16 %v867, %v863
    %v1172 = vpack.c.b16 %v872, %v868
    %v1173 = vpack.c.b16 %v873, %v869
    %v1174 = vpack.c.b16 %v874, %v870
    %v1175 = vpack.c.b16 %v875, %v871
    %v1176 = vpack.c.b16 %v880, %v876
    %v1177 = vpack.c.b16 %v881, %v877
    %v1178 = vpack.c.b16 %v882, %v878
    %v1179 = vpack.c.b16 %v883, %v879
    %v1180 = vpack.c.b16 %v888, %v884
    %v1181 = vpack.c.b16 %v889, %v885
    %v1182 = vpack.c.b16 %v890, %v886
    %v1183 = vpack.c.b16 %v891, %v887
    %v1184 = vpack.c.b16 %v896, %v892
    %v1185 = vpack.c.b16 %v897, %v893
    %v1186 = vpack.c.b16 %v898, %v894
    %v1187 = vpack.c.b16 %v899, %v895
    %v1188 = vpack.c.b16 %v904, %v900
    %v1189 = vpack.c.b16 %v905, %v901
    %v1190 = vpack.c.b16 %v906, %v902
    %v1191 = vpack.c.b16 %v907, %v903
    %v1192 = vpack.c.b16 %v912, %v908
    %v1193 = vpack.c.b16 %v913, %v909
    %v1194 = vpack.c.b16 %v914, %v910
    %v1195 = vpack.c.b16 %v915, %v911
    %v1196 = vpack.c.b16 %v920, %v916
    %v1197 = vpack.c.b16 %v921, %v917
    %v1198 = vpack.c.b16 %v922, %v918
    %v1199 = vpack.c.b16 %v923, %v919
    %v1200 = vpack.c.b16 %v928, %v924
    %v1201 = vpack.c.b16 %v929, %v925
    %v1202 = vpack.c.b16 %v930, %v926
    %v1203 = vpack.c.b16 %v931, %v927
    %v1204 = vpack.c.b16 %v936, %v932
    %v1205 = vpack.c.b16 %v937, %v933
    %v1206 = vpack.c.b16 %v938, %v934
    %v1207 = vpack.c.b16 %v939, %v935
    %v1208 = vpack.c.b16 %v944, %v940
    %v1209 = vpack.c.b16 %v945, %v941
    %v1210 = vpack.c.b16 %v946, %v942
    %v1211 = vpack.c.b16 %v947, %v943
    %v1212 = vpack.c.b16 %v952, %v948
    %v1213 = vpack.c.b16 %v953, %v949
    %v1214 = vpack.c.b16 %v954, %v950
    %v1215 = vpack.c.b16 %v955, %v951
    %v1216 = vpack.c.b16 %v960, %v956
    %v1217 = vpack.c.b16 %v961, %v957
    %v1218 = vpack.c.b16 %v962, %v958
    %v1219 = vpack.c.b16 %v963, %v959
    %v1220 = vpack.c.b16 %v968, %v964
    %v1221 = vpack.c.b16 %v969, %v965
    %v1222 = vpack.c.b16 %v970, %v966
    %v1223 = vpack.c.b16 %v971, %v967
    %v1224 = vpack.c.b16 %v976, %v972
    %v1225 = vpack.c.b16 %v977, %v973
    %v1226 = vpack.c.b16 %v978, %v974
    %v1227 = vpack.c.b16 %v979, %v975
    %v1228 = vpack.c.b16 %v984, %v980
    %v1229 = vpack.c.b16 %v985, %v981
    %v1230 = vpack.c.b16 %v986, %v982
    %v1231 = vpack.c.b16 %v987, %v983
    %v1232 = vpack.c.b16 %v992, %v988
    %v1233 = vpack.c.b16 %v993, %v989
    %v1234 = vpack.c.b16 %v994, %v990
    %v1235 = vpack.c.b16 %v995, %v991
    %v1236 = vpack.c.b16 %v1000, %v996
    %v1237 = vpack.c.b16 %v1001, %v997
    %v1238 = vpack.c.b16 %v1002, %v998
    %v1239 = vpack.c.b16 %v1003, %v999
    %v1240 = vpack.c.b16 %v1008, %v1004
    %v1241 = vpack.c.b16 %v1009, %v1005
    %v1242 = vpack.c.b16 %v1010, %v1006
    %v1243 = vpack.c.b16 %v1011, %v1007
    %v1244 = vpack.c.b16 %v1016, %v1012
    %v1245 = vpack.c.b16 %v1017, %v1013
    %v1246 = vpack.c.b16 %v1018, %v1014
    %v1247 = vpack.c.b16 %v1019, %v1015
    %v1248 = vpack.c.b16 %v1024, %v1020
    %v1249 = vpack.c.b16 %v1025, %v1021
    %v1250 = vpack.c.b16 %v1026, %v1022
    %v1251 = vpack.c.b16 %v1027, %v1023
    %v1252 = vpack.c.b16 %v1032, %v1028
    %v1253 = vpack.c.b16 %v1033, %v1029
    %v1254 = vpack.c.b16 %v1034, %v1030
    %v1255 = vpack.c.b16 %v1035, %v1031
    %v1256 = vpack.c.b16 %v1040, %v1036
    %v1257 = vpack.c.b16 %v1041, %v1037
    %v1258 = vpack.c.b16 %v1042, %v1038
    %v1259 = vpack.c.b16 %v1043, %v1039
    %v1260 = vpack.c.b16 %v1048, %v1044
    %v1261 = vpack.c.b16 %v1049, %v1045
    %v1262 = vpack.c.b16 %v1050, %v1046
    %v1263 = vpack.c.b16 %v1051, %v1047
    %v1264 = vpack.c.b16 %v1056, %v1052
    %v1265 = vpack.c.b16 %v1057, %v1053
    %v1266 = vpack.c.b16 %v1058, %v1054
    %v1267 = vpack.c.b16 %v1059, %v1055
    %v1268 = vpack.c.b16 %v1064, %v1060
    %v1269 = vpack.c.b16 %v1065, %v1061
    %v1270 = vpack.c.b16 %v1066, %v1062
    %v1271 = vpack.c.b16 %v1067, %v1063
    %v1272 = vpack.c.b16 %v1072, %v1068
    %v1273 = vpack.c.b16 %v1073, %v1069
    %v1274 = vpack.c.b16 %v1074, %v1070
    %v1275 = vpack.c.b16 %v1075, %v1071
    %v1276 = vpack.c.b16 %v1080, %v1076
    %v1277 = vpack.c.b16 %v1081, %v1077
    %v1278 = vpack.c.b16 %v1082, %v1078
    %v1279 = vpack.c.b16 %v1083, %v1079
    %vm1476 = vcmask 130048
    %v1478 = vsel %vm1476, %v489, 0
    %1480 = vmatprep.subr.bf16.mxu0 %v1085
    %1481 = vmatpush1.bf16.msra.mxu0 %v1084
    %1482 = vmatprep.subr.bf16.mxu0 %v1089
    %1483 = vmatpush1.bf16.msra.mxu0 %v1088
    %1484 = vmatprep.subr.bf16.mxu0 %v1093
    %1485 = vmatpush1.bf16.msra.mxu0 %v1092
    %1486 = vmatprep.subr.bf16.mxu0 %v1097
    %1487 = vmatpush1.bf16.msra.mxu0 %v1096
    %1488 = vmatprep.subr.bf16.mxu0 %v1101
    %1489 = vmatpush1.bf16.msra.mxu0 %v1100
    %1490 = vmatprep.subr.bf16.mxu0 %v1105
    %1491 = vmatpush1.bf16.msra.mxu0 %v1104
    %1492 = vmatprep.subr.bf16.mxu0 %v1109
    %1493 = vmatpush1.bf16.msra.mxu0 %v1108
    %1494 = vmatprep.subr.bf16.mxu0 %v1113
    %1495 = vmatpush1.bf16.msra.mxu0 %v1112
    %1496 = vmatprep.subr.bf16.mxu0 %v1117
    %1497 = vmatpush1.bf16.msra.mxu0 %v1116
    %1498 = vmatprep.subr.bf16.mxu0 %v1121
    %1499 = vmatpush1.bf16.msra.mxu0 %v1120
    %1500 = vmatprep.subr.bf16.mxu0 %v1125
    %1501 = vmatpush1.bf16.msra.mxu0 %v1124
    %1502 = vmatprep.subr.bf16.mxu0 %v1129
    %1503 = vmatpush1.bf16.msra.mxu0 %v1128
    %1504 = vmatprep.subr.bf16.mxu0 %v1133
    %1505 = vmatpush1.bf16.msra.mxu0 %v1132
    %1506 = vmatprep.subr.bf16.mxu0 %v1137
    %1507 = vmatpush1.bf16.msra.mxu0 %v1136
    %1508 = vmatprep.subr.bf16.mxu0 %v1141
    %1509 = vmatpush1.bf16.msra.mxu0 %v1140
    %1510 = vmatprep.subr.bf16.mxu0 %v1145
    %1511 = vmatpush1.bf16.msra.mxu0 %v1144
    %1512 = vmatprep.mubr.bf16.mxu0 %v484
    %1513 = vmatmul.mubr.bf16.gmra.mrb[0].mxu0 %v483
    %v1514 = vpop.f32.mrb[0].mxu0
    %v1515 = vadd.f32 %v444, %v1514
    %v1516 = vpop.f32.mrb[0].mxu0
    %v1517 = vadd.f32 %v448, %v1516
    %v1518 = vpop.f32.mrb[0].mxu0
    %v1519 = vadd.f32 %v444, %v1518
    %v1520 = vpop.f32.mrb[0].mxu0
    %v1521 = vadd.f32 %v448, %v1520
    %1522 = vdwg.mxu0
    %1523 = vmatprep.subr.bf16.mxu0 %v1149
    %1524 = vmatpush1.bf16.msra.mxu0 %v1148
    %1525 = vmatprep.subr.bf16.mxu0 %v1153
    %1526 = vmatpush1.bf16.msra.mxu0 %v1152
    %1527 = vmatprep.subr.bf16.mxu0 %v1157
    %1528 = vmatpush1.bf16.msra.mxu0 %v1156
    %1529 = vmatprep.subr.bf16.mxu0 %v1161
    %1530 = vmatpush1.bf16.msra.mxu0 %v1160
    %1531 = vmatprep.subr.bf16.mxu0 %v1165
    %1532 = vmatpush1.bf16.msra.mxu0 %v1164
    %1533 = vmatprep.subr.bf16.mxu0 %v1169
    %1534 = vmatpush1.bf16.msra.mxu0 %v1168
    %1535 = vmatprep.subr.bf16.mxu0 %v1173
    %1536 = vmatpush1.bf16.msra.mxu0 %v1172
    %1537 = vmatprep.subr.bf16.mxu0 %v1177
    %1538 = vmatpush1.bf16.msra.mxu0 %v1176
    %1539 = vmatprep.subr.bf16.mxu0 %v1181
    %1540 = vmatpush1.bf16.msra.mxu0 %v1180
    %1541 = vmatprep.subr.bf16.mxu0 %v1185
    %1542 = vmatpush1.bf16.msra.mxu0 %v1184
    %1543 = vmatprep.subr.bf16.mxu0 %v1189
    %1544 = vmatpush1.bf16.msra.mxu0 %v1188
    %1545 = vmatprep.subr.bf16.mxu0 %v1193
    %1546 = vmatpush1.bf16.msra.mxu0 %v1192
    %1547 = vmatprep.subr.bf16.mxu0 %v1197
    %1548 = vmatpush1.bf16.msra.mxu0 %v1196
    %1549 = vmatprep.subr.bf16.mxu0 %v1201
    %1550 = vmatpush1.bf16.msra.mxu0 %v1200
    %1551 = vmatprep.subr.bf16.mxu0 %v1205
    %1552 = vmatpush1.bf16.msra.mxu0 %v1204
    %1553 = vmatprep.subr.bf16.mxu0 %v1209
    %1554 = vmatpush1.bf16.msra.mxu0 %v1208
    %1555 = vmatprep.mubr.bf16.mxu0 %v486
    %1556 = vmatmul.mubr.bf16.gmra.mrb[0].mxu0 %v485
    %v1557 = vpop.f32.mrb[0].mxu0
    %v1558 = vadd.f32 %v1515, %v1557
    %v1559 = vpop.f32.mrb[0].mxu0
    %v1560 = vadd.f32 %v1517, %v1559
    %v1561 = vpop.f32.mrb[0].mxu0
    %v1562 = vadd.f32 %v1519, %v1561
    %v1563 = vpop.f32.mrb[0].mxu0
    %v1564 = vadd.f32 %v1521, %v1563
    %1565 = vdwg.mxu0
    %1566 = vmatprep.subr.bf16.mxu0 %v1213
    %1567 = vmatpush1.bf16.msra.mxu0 %v1212
    %1568 = vmatprep.subr.bf16.mxu0 %v1217
    %1569 = vmatpush1.bf16.msra.mxu0 %v1216
    %1570 = vmatprep.subr.bf16.mxu0 %v1221
    %1571 = vmatpush1.bf16.msra.mxu0 %v1220
    %1572 = vmatprep.subr.bf16.mxu0 %v1225
    %1573 = vmatpush1.bf16.msra.mxu0 %v1224
    %1574 = vmatprep.subr.bf16.mxu0 %v1229
    %1575 = vmatpush1.bf16.msra.mxu0 %v1228
    %1576 = vmatprep.subr.bf16.mxu0 %v1233
    %1577 = vmatpush1.bf16.msra.mxu0 %v1232
    %1578 = vmatprep.subr.bf16.mxu0 %v1237
    %1579 = vmatpush1.bf16.msra.mxu0 %v1236
    %1580 = vmatprep.subr.bf16.mxu0 %v1241
    %1581 = vmatpush1.bf16.msra.mxu0 %v1240
    %1582 = vmatprep.subr.bf16.mxu0 %v1245
    %1583 = vmatpush1.bf16.msra.mxu0 %v1244
    %1584 = vmatprep.subr.bf16.mxu0 %v1249
    %1585 = vmatpush1.bf16.msra.mxu0 %v1248
    %1586 = vmatprep.subr.bf16.mxu0 %v1253
    %1587 = vmatpush1.bf16.msra.mxu0 %v1252
    %1588 = vmatprep.subr.bf16.mxu0 %v1257
    %1589 = vmatpush1.bf16.msra.mxu0 %v1256
    %1590 = vmatprep.subr.bf16.mxu0 %v1261
    %1591 = vmatpush1.bf16.msra.mxu0 %v1260
    %1592 = vmatprep.subr.bf16.mxu0 %v1265
    %1593 = vmatpush1.bf16.msra.mxu0 %v1264
    %1594 = vmatprep.subr.bf16.mxu0 %v1269
    %1595 = vmatpush1.bf16.msra.mxu0 %v1268
    %1596 = vmatprep.subr.bf16.mxu0 %v1273
    %1597 = vmatpush1.bf16.msra.mxu0 %v1272
    %1598 = vmatprep.mubr.bf16.mxu0 %v488
    %1599 = vmatmul.mubr.bf16.gmra.mrb[0].mxu0 %v487
    %v1600 = vpop.f32.mrb[0].mxu0
    %v1601 = vadd.f32 %v1558, %v1600
    %v1602 = vpop.f32.mrb[0].mxu0
    %v1603 = vadd.f32 %v1560, %v1602
    %v1604 = vpop.f32.mrb[0].mxu0
    %v1605 = vadd.f32 %v1562, %v1604
    %v1606 = vpop.f32.mrb[0].mxu0
    %v1607 = vadd.f32 %v1564, %v1606
    %1608 = vdwg.mxu0
    %1609 = vmatprep.subr.bf16.mxu0 %v1277
    %1610 = vmatpush1.bf16.msra.mxu0 %v1276
    %1611 = vmatprep.subr.bf16.mxu0 0
    %1612 = vmatpush1.bf16.msra.mxu0 0
    %1613 = vmatprep.subr.bf16.mxu0 0
    %1614 = vmatpush1.bf16.msra.mxu0 0
    %1615 = vmatprep.subr.bf16.mxu0 0
    %1616 = vmatpush1.bf16.msra.mxu0 0
    %1617 = vmatprep.subr.bf16.mxu0 0
    %1618 = vmatpush1.bf16.msra.mxu0 0
    %1619 = vmatprep.subr.bf16.mxu0 0
    %1620 = vmatpush1.bf16.msra.mxu0 0
    %1621 = vmatprep.subr.bf16.mxu0 0
    %1622 = vmatpush1.bf16.msra.mxu0 0
    %1623 = vmatprep.subr.bf16.mxu0 0
    %1624 = vmatpush1.bf16.msra.mxu0 0
    %1625 = vmatprep.subr.bf16.mxu0 0
    %1626 = vmatpush1.bf16.msra.mxu0 0
    %1627 = vmatprep.subr.bf16.mxu0 0
    %1628 = vmatpush1.bf16.msra.mxu0 0
    %1629 = vmatprep.subr.bf16.mxu0 0
    %1630 = vmatpush1.bf16.msra.mxu0 0
    %1631 = vmatprep.subr.bf16.mxu0 0
    %1632 = vmatpush1.bf16.msra.mxu0 0
    %1633 = vmatprep.subr.bf16.mxu0 0
    %1634 = vmatpush1.bf16.msra.mxu0 0
    %1635 = vmatprep.subr.bf16.mxu0 0
    %1636 = vmatpush1.bf16.msra.mxu0 0
    %1637 = vmatprep.subr.bf16.mxu0 0
    %1638 = vmatpush1.bf16.msra.mxu0 0
    %1639 = vmatprep.subr.bf16.mxu0 0
    %1640 = vmatpush1.bf16.msra.mxu0 0
    %1641 = vmatprep.mubr.bf16.mxu0 0
    %1642 = vmatmul.mubr.bf16.gmra.mrb[0].mxu0 %v1478
    %v1643 = vpop.f32.mrb[0].mxu0
    %v1644 = vadd.f32 %v1601, %v1643
    %v1645 = vpop.f32.mrb[0].mxu0
    %v1646 = vadd.f32 %v1603, %v1645
    %v1647 = vpop.f32.mrb[0].mxu0
    %v1648 = vadd.f32 %v1605, %v1647
    %v1649 = vpop.f32.mrb[0].mxu0
    %v1650 = vadd.f32 %v1607, %v1649
    %1651 = vdwg.mxu0
    %1652 = vmatprep.subr.bf16.mxu0 %v1087
    %1653 = vmatpush1.bf16.msra.mxu0 %v1086
    %1654 = vmatprep.subr.bf16.mxu0 %v1091
    %1655 = vmatpush1.bf16.msra.mxu0 %v1090
    %1656 = vmatprep.subr.bf16.mxu0 %v1095
    %1657 = vmatpush1.bf16.msra.mxu0 %v1094
    %1658 = vmatprep.subr.bf16.mxu0 %v1099
    %1659 = vmatpush1.bf16.msra.mxu0 %v1098
    %1660 = vmatprep.subr.bf16.mxu0 %v1103
    %1661 = vmatpush1.bf16.msra.mxu0 %v1102
    %1662 = vmatprep.subr.bf16.mxu0 %v1107
    %1663 = vmatpush1.bf16.msra.mxu0 %v1106
    %1664 = vmatprep.subr.bf16.mxu0 %v1111
    %1665 = vmatpush1.bf16.msra.mxu0 %v1110
    %1666 = vmatprep.subr.bf16.mxu0 %v1115
    %1667 = vmatpush1.bf16.msra.mxu0 %v1114
    %1668 = vmatprep.subr.bf16.mxu0 %v1119
    %1669 = vmatpush1.bf16.msra.mxu0 %v1118
    %1670 = vmatprep.subr.bf16.mxu0 %v1123
    %1671 = vmatpush1.bf16.msra.mxu0 %v1122
    %1672 = vmatprep.subr.bf16.mxu0 %v1127
    %1673 = vmatpush1.bf16.msra.mxu0 %v1126
    %1674 = vmatprep.subr.bf16.mxu0 %v1131
    %1675 = vmatpush1.bf16.msra.mxu0 %v1130
    %1676 = vmatprep.subr.bf16.mxu0 %v1135
    %1677 = vmatpush1.bf16.msra.mxu0 %v1134
    %1678 = vmatprep.subr.bf16.mxu0 %v1139
    %1679 = vmatpush1.bf16.msra.mxu0 %v1138
    %1680 = vmatprep.subr.bf16.mxu0 %v1143
    %1681 = vmatpush1.bf16.msra.mxu0 %v1142
    %1682 = vmatprep.subr.bf16.mxu0 %v1147
    %1683 = vmatpush1.bf16.msra.mxu0 %v1146
    %1684 = vmatprep.mubr.bf16.mxu0 %v484
    %1685 = vmatmul.mubr.bf16.gmra.mrb[0].mxu0 %v483
    %v1686 = vpop.f32.mrb[0].mxu0
    %v1687 = vadd.f32 %v452, %v1686
    %v1688 = vpop.f32.mrb[0].mxu0
    %v1689 = vadd.f32 %v456, %v1688
    %v1690 = vpop.f32.mrb[0].mxu0
    %v1691 = vadd.f32 %v452, %v1690
    %v1692 = vpop.f32.mrb[0].mxu0
    %v1693 = vadd.f32 %v456, %v1692
    %1694 = vdwg.mxu0
    %1695 = vmatprep.subr.bf16.mxu0 %v1151
    %1696 = vmatpush1.bf16.msra.mxu0 %v1150
    %1697 = vmatprep.subr.bf16.mxu0 %v1155
    %1698 = vmatpush1.bf16.msra.mxu0 %v1154
    %1699 = vmatprep.subr.bf16.mxu0 %v1159
    %1700 = vmatpush1.bf16.msra.mxu0 %v1158
    %1701 = vmatprep.subr.bf16.mxu0 %v1163
    %1702 = vmatpush1.bf16.msra.mxu0 %v1162
    %1703 = vmatprep.subr.bf16.mxu0 %v1167
    %1704 = vmatpush1.bf16.msra.mxu0 %v1166
    %1705 = vmatprep.subr.bf16.mxu0 %v1171
    %1706 = vmatpush1.bf16.msra.mxu0 %v1170
    %1707 = vmatprep.subr.bf16.mxu0 %v1175
    %1708 = vmatpush1.bf16.msra.mxu0 %v1174
    %1709 = vmatprep.subr.bf16.mxu0 %v1179
    %1710 = vmatpush1.bf16.msra.mxu0 %v1178
    %1711 = vmatprep.subr.bf16.mxu0 %v1183
    %1712 = vmatpush1.bf16.msra.mxu0 %v1182
    %1713 = vmatprep.subr.bf16.mxu0 %v1187
    %1714 = vmatpush1.bf16.msra.mxu0 %v1186
    %1715 = vmatprep.subr.bf16.mxu0 %v1191
    %1716 = vmatpush1.bf16.msra.mxu0 %v1190
    %1717 = vmatprep.subr.bf16.mxu0 %v1195
    %1718 = vmatpush1.bf16.msra.mxu0 %v1194
    %1719 = vmatprep.subr.bf16.mxu0 %v1199
    %1720 = vmatpush1.bf16.msra.mxu0 %v1198
    %1721 = vmatprep.subr.bf16.mxu0 %v1203
    %1722 = vmatpush1.bf16.msra.mxu0 %v1202
    %1723 = vmatprep.subr.bf16.mxu0 %v1207
    %1724 = vmatpush1.bf16.msra.mxu0 %v1206
    %1725 = vmatprep.subr.bf16.mxu0 %v1211
    %1726 = vmatpush1.bf16.msra.mxu0 %v1210
    %1727 = vmatprep.mubr.bf16.mxu0 %v486
    %1728 = vmatmul.mubr.bf16.gmra.mrb[0].mxu0 %v485
    %v1729 = vpop.f32.mrb[0].mxu0
    %v1730 = vadd.f32 %v1687, %v1729
    %v1731 = vpop.f32.mrb[0].mxu0
    %v1732 = vadd.f32 %v1689, %v1731
    %v1733 = vpop.f32.mrb[0].mxu0
    %v1734 = vadd.f32 %v1691, %v1733
    %v1735 = vpop.f32.mrb[0].mxu0
    %v1736 = vadd.f32 %v1693, %v1735
    %1737 = vdwg.mxu0
    %1738 = vmatprep.subr.bf16.mxu0 %v1215
    %1739 = vmatpush1.bf16.msra.mxu0 %v1214
    %1740 = vmatprep.subr.bf16.mxu0 %v1219
    %1741 = vmatpush1.bf16.msra.mxu0 %v1218
    %1742 = vmatprep.subr.bf16.mxu0 %v1223
    %1743 = vmatpush1.bf16.msra.mxu0 %v1222
    %1744 = vmatprep.subr.bf16.mxu0 %v1227
    %1745 = vmatpush1.bf16.msra.mxu0 %v1226
    %1746 = vmatprep.subr.bf16.mxu0 %v1231
    %1747 = vmatpush1.bf16.msra.mxu0 %v1230
    %1748 = vmatprep.subr.bf16.mxu0 %v1235
    %1749 = vmatpush1.bf16.msra.mxu0 %v1234
    %1750 = vmatprep.subr.bf16.mxu0 %v1239
    %1751 = vmatpush1.bf16.msra.mxu0 %v1238
    %1752 = vmatprep.subr.bf16.mxu0 %v1243
    %1753 = vmatpush1.bf16.msra.mxu0 %v1242
    %1754 = vmatprep.subr.bf16.mxu0 %v1247
    %1755 = vmatpush1.bf16.msra.mxu0 %v1246
    %1756 = vmatprep.subr.bf16.mxu0 %v1251
    %1757 = vmatpush1.bf16.msra.mxu0 %v1250
    %1758 = vmatprep.subr.bf16.mxu0 %v1255
    %1759 = vmatpush1.bf16.msra.mxu0 %v1254
    %1760 = vmatprep.subr.bf16.mxu0 %v1259
    %1761 = vmatpush1.bf16.msra.mxu0 %v1258
    %1762 = vmatprep.subr.bf16.mxu0 %v1263
    %1763 = vmatpush1.bf16.msra.mxu0 %v1262
    %1764 = vmatprep.subr.bf16.mxu0 %v1267
    %1765 = vmatpush1.bf16.msra.mxu0 %v1266
    %1766 = vmatprep.subr.bf16.mxu0 %v1271
    %1767 = vmatpush1.bf16.msra.mxu0 %v1270
    %1768 = vmatprep.subr.bf16.mxu0 %v1275
    %1769 = vmatpush1.bf16.msra.mxu0 %v1274
    %1770 = vmatprep.mubr.bf16.mxu0 %v488
    %1771 = vmatmul.mubr.bf16.gmra.mrb[0].mxu0 %v487
    %v1772 = vpop.f32.mrb[0].mxu0
    %v1773 = vadd.f32 %v1730, %v1772
    %v1774 = vpop.f32.mrb[0].mxu0
    %v1775 = vadd.f32 %v1732, %v1774
    %v1776 = vpop.f32.mrb[0].mxu0
    %v1777 = vadd.f32 %v1734, %v1776
    %v1778 = vpop.f32.mrb[0].mxu0
    %v1779 = vadd.f32 %v1736, %v1778
    %1780 = vdwg.mxu0
    %1781 = vmatprep.subr.bf16.mxu0 %v1279
    %1782 = vmatpush1.bf16.msra.mxu0 %v1278
    %1783 = vmatprep.subr.bf16.mxu0 0
    %1784 = vmatpush1.bf16.msra.mxu0 0
    %1785 = vmatprep.subr.bf16.mxu0 0
    %1786 = vmatpush1.bf16.msra.mxu0 0
    %1787 = vmatprep.subr.bf16.mxu0 0
    %1788 = vmatpush1.bf16.msra.mxu0 0
    %1789 = vmatprep.subr.bf16.mxu0 0
    %1790 = vmatpush1.bf16.msra.mxu0 0
    %1791 = vmatprep.subr.bf16.mxu0 0
    %1792 = vmatpush1.bf16.msra.mxu0 0
    %1793 = vmatprep.subr.bf16.mxu0 0
    %1794 = vmatpush1.bf16.msra.mxu0 0
    %1795 = vmatprep.subr.bf16.mxu0 0
    %1796 = vmatpush1.bf16.msra.mxu0 0
    %1797 = vmatprep.subr.bf16.mxu0 0
    %1798 = vmatpush1.bf16.msra.mxu0 0
    %1799 = vmatprep.subr.bf16.mxu0 0
    %1800 = vmatpush1.bf16.msra.mxu0 0
    %1801 = vmatprep.subr.bf16.mxu0 0
    %1802 = vmatpush1.bf16.msra.mxu0 0
    %1803 = vmatprep.subr.bf16.mxu0 0
    %1804 = vmatpush1.bf16.msra.mxu0 0
    %1805 = vmatprep.subr.bf16.mxu0 0
    %1806 = vmatpush1.bf16.msra.mxu0 0
    %1807 = vmatprep.subr.bf16.mxu0 0
    %1808 = vmatpush1.bf16.msra.mxu0 0
    %1809 = vmatprep.subr.bf16.mxu0 0
    %1810 = vmatpush1.bf16.msra.mxu0 0
    %1811 = vmatprep.subr.bf16.mxu0 0
    %1812 = vmatpush1.bf16.msra.mxu0 0
    %1813 = vmatprep.mubr.bf16.mxu0 0
    %1814 = vmatmul.mubr.bf16.gmra.mrb[0].mxu0 %v1478
    %v1815 = vpop.f32.mrb[0].mxu0
    %v1816 = vadd.f32 %v1773, %v1815
    %v1817 = vpop.f32.mrb[0].mxu0
    %v1818 = vadd.f32 %v1775, %v1817
    %v1819 = vpop.f32.mrb[0].mxu0
    %v1820 = vadd.f32 %v1777, %v1819
    %v1821 = vpop.f32.mrb[0].mxu0
    %v1822 = vadd.f32 %v1779, %v1821
    %1823 = vdwg.mxu0
    %v1824 = vmax.f32 %v1644, 0.0
    %v1825 = vmax.f32 %v1646, 0.0
    %v1826 = vmax.f32 %v1816, 0.0
    %v1827 = vmax.f32 %v1818, 0.0
    %v1828 = vmax.f32 %v1648, 0.0
    %v1829 = vmax.f32 %v1650, 0.0
    %v1830 = vmax.f32 %v1820, 0.0
    %v1831 = vmax.f32 %v1822, 0.0
    %v1832 = vpack.c.bf16 %v1828, %v1824
    %v1833 = vpack.c.bf16 %v1829, %v1825
    %v1834 = vpack.c.bf16 %v1830, %v1826
    %v1835 = vpack.c.bf16 %v1831, %v1827
    %v1836 = vld [vmem:[#allocation9] sm:$0xf]
    %v1837 = vld [vmem:[#allocation9 + $0x4] sm:$0xf]
    %v1838 = vld [vmem:[#allocation9 + $0x8] sm:$0xf]
    %v1839 = vld [vmem:[#allocation9 + $0xc] sm:$0xf]
    %v1840 = vld [vmem:[#allocation9 + $0x10] sm:$0xf]
    %v1841 = vld [vmem:[#allocation9 + $0x14] sm:$0xf]
    %v1842 = vld [vmem:[#allocation9 + $0x18] sm:$0xf]
    %v1843 = vld [vmem:[#allocation9 + $0x1c] sm:$0xf]
    %v1844 = vld [vmem:[#allocation9 + $0x20] sm:$0xf]
    %v1845 = vld [vmem:[#allocation9 + $0x24] sm:$0xf]
    %v1846 = vld [vmem:[#allocation9 + $0x28] sm:$0xf]
    %v1847 = vld [vmem:[#allocation9 + $0x2c] sm:$0xf]
    %v1848 = vld [vmem:[#allocation9 + $0x30] sm:$0xf]
    %v1849 = vld [vmem:[#allocation9 + $0x34] sm:$0xf]
    %v1850 = vld [vmem:[#allocation9 + $0x38] sm:$0xf]
    %v1851 = vld [vmem:[#allocation9 + $0x3c] sm:$0xf]
    %v1852 = vld [vmem:[#allocation9 + $0x40] sm:$0xf]
    %v1853 = vld [vmem:[#allocation9 + $0x44] sm:$0xf]
    %v1854 = vld [vmem:[#allocation9 + $0x48] sm:$0xf]
    %v1855 = vld [vmem:[#allocation9 + $0x4c] sm:$0xf]
    %v1856 = vld [vmem:[#allocation9 + $0x50] sm:$0xf]
    %v1857 = vld [vmem:[#allocation9 + $0x54] sm:$0xf]
    %v1858 = vld [vmem:[#allocation9 + $0x58] sm:$0xf]
    %v1859 = vld [vmem:[#allocation9 + $0x5c] sm:$0xf]
    %v1860 = vld [vmem:[#allocation9 + $0x60] sm:$0xf]
    %v1861 = vld [vmem:[#allocation9 + $0x64] sm:$0xf]
    %v1862 = vld [vmem:[#allocation9 + $0x68] sm:$0xf]
    %v1863 = vld [vmem:[#allocation9 + $0x6c] sm:$0xf]
    %v1864 = vld [vmem:[#allocation9 + $0x70] sm:$0xf]
    %v1865 = vld [vmem:[#allocation9 + $0x74] sm:$0xf]
    %v1866 = vld [vmem:[#allocation9 + $0x78] sm:$0xf]
    %v1867 = vld [vmem:[#allocation9 + $0x7c] sm:$0xf]
    %v1868 = vld [vmem:[#allocation9 + $0x80] sm:$0xf]
    %v1869 = vld [vmem:[#allocation9 + $0x84] sm:$0xf]
    %v1870 = vld [vmem:[#allocation9 + $0x88] sm:$0xf]
    %v1871 = vld [vmem:[#allocation9 + $0x8c] sm:$0xf]
    %v1872 = vld [vmem:[#allocation9 + $0x90] sm:$0xf]
    %v1873 = vld [vmem:[#allocation9 + $0x94] sm:$0xf]
    %v1874 = vld [vmem:[#allocation9 + $0x98] sm:$0xf]
    %v1875 = vld [vmem:[#allocation9 + $0x9c] sm:$0xf]
    %v1876 = vld [vmem:[#allocation9 + $0xa0] sm:$0xf]
    %v1877 = vld [vmem:[#allocation9 + $0xa4] sm:$0xf]
    %v1878 = vld [vmem:[#allocation9 + $0xa8] sm:$0xf]
    %v1879 = vld [vmem:[#allocation9 + $0xac] sm:$0xf]
    %v1880 = vld [vmem:[#allocation9 + $0xb0] sm:$0xf]
    %v1881 = vld [vmem:[#allocation9 + $0xb4] sm:$0xf]
    %v1882 = vld [vmem:[#allocation9 + $0xb8] sm:$0xf]
    %v1883 = vld [vmem:[#allocation9 + $0xbc] sm:$0xf]
    %v1884 = vld [vmem:[#allocation9 + $0xc0] sm:$0xf]
    %v1885 = vld [vmem:[#allocation9 + $0xc4] sm:$0xf]
    %v1886 = vld [vmem:[#allocation9 + $0xc8] sm:$0xf]
    %v1887 = vld [vmem:[#allocation9 + $0xcc] sm:$0xf]
    %v1888 = vld [vmem:[#allocation9 + $0xd0] sm:$0xf]
    %v1889 = vld [vmem:[#allocation9 + $0xd4] sm:$0xf]
    %v1890 = vld [vmem:[#allocation9 + $0xd8] sm:$0xf]
    %v1891 = vld [vmem:[#allocation9 + $0xdc] sm:$0xf]
    %v1892 = vld [vmem:[#allocation9 + $0xe0] sm:$0xf]
    %v1893 = vld [vmem:[#allocation9 + $0xe4] sm:$0xf]
    %v1894 = vld [vmem:[#allocation9 + $0xe8] sm:$0xf]
    %v1895 = vld [vmem:[#allocation9 + $0xec] sm:$0xf]
    %v1896 = vld [vmem:[#allocation9 + $0xf0] sm:$0xf]
    %v1897 = vld [vmem:[#allocation9 + $0xf4] sm:$0xf]
    %v1898 = vld [vmem:[#allocation9 + $0xf8] sm:$0xf]
    %v1899 = vld [vmem:[#allocation9 + $0xfc] sm:$0xf]
    %v1900 = vld [vmem:[%s3] sm:$0x1]
    %v1902 = vlaneseq
    %v1903 = vshrl.u32 %v1902, 7
    %v1904 = vsub.s32 0, %v1903
    %v1905 = vrot.slane %v1900, %v1904
    %v1971 = vunpack.c.l.b16 %v1836
    %v1972 = vunpack.c.l.b16 %v1837
    %v1973 = vunpack.c.l.b16 %v1838
    %v1974 = vunpack.c.l.b16 %v1839
    %v1975 = vunpack.c.l.b16 %v1840
    %v1976 = vunpack.c.l.b16 %v1841
    %v1977 = vunpack.c.l.b16 %v1842
    %v1978 = vunpack.c.l.b16 %v1843
    %v1979 = vunpack.c.l.b16 %v1844
    %v1980 = vunpack.c.l.b16 %v1845
    %v1981 = vunpack.c.l.b16 %v1846
    %v1982 = vunpack.c.l.b16 %v1847
    %v1983 = vunpack.c.l.b16 %v1848
    %v1984 = vunpack.c.l.b16 %v1849
    %v1985 = vunpack.c.l.b16 %v1850
    %v1986 = vunpack.c.l.b16 %v1851
    %v1987 = vunpack.c.l.b16 %v1852
    %v1988 = vunpack.c.l.b16 %v1853
    %v1989 = vunpack.c.l.b16 %v1854
    %v1990 = vunpack.c.l.b16 %v1855
    %v1991 = vunpack.c.l.b16 %v1856
    %v1992 = vunpack.c.l.b16 %v1857
    %v1993 = vunpack.c.l.b16 %v1858
    %v1994 = vunpack.c.l.b16 %v1859
    %v1995 = vunpack.c.l.b16 %v1860
    %v1996 = vunpack.c.l.b16 %v1861
    %v1997 = vunpack.c.l.b16 %v1862
    %v1998 = vunpack.c.l.b16 %v1863
    %v1999 = vunpack.c.l.b16 %v1864
    %v2000 = vunpack.c.l.b16 %v1865
    %v2001 = vunpack.c.l.b16 %v1866
    %v2002 = vunpack.c.l.b16 %v1867
    %v2003 = vunpack.c.l.b16 %v1868
    %v2004 = vunpack.c.l.b16 %v1869
    %v2005 = vunpack.c.l.b16 %v1870
    %v2006 = vunpack.c.l.b16 %v1871
    %v2007 = vunpack.c.l.b16 %v1872
    %v2008 = vunpack.c.l.b16 %v1873
    %v2009 = vunpack.c.l.b16 %v1874
    %v2010 = vunpack.c.l.b16 %v1875
    %v2011 = vunpack.c.l.b16 %v1876
    %v2012 = vunpack.c.l.b16 %v1877
    %v2013 = vunpack.c.l.b16 %v1878
    %v2014 = vunpack.c.l.b16 %v1879
    %v2015 = vunpack.c.l.b16 %v1880
    %v2016 = vunpack.c.l.b16 %v1881
    %v2017 = vunpack.c.l.b16 %v1882
    %v2018 = vunpack.c.l.b16 %v1883
    %v2019 = vunpack.c.l.b16 %v1884
    %v2020 = vunpack.c.l.b16 %v1885
    %v2021 = vunpack.c.l.b16 %v1886
    %v2022 = vunpack.c.l.b16 %v1887
    %v2023 = vunpack.c.l.b16 %v1888
    %v2024 = vunpack.c.l.b16 %v1889
    %v2025 = vunpack.c.l.b16 %v1890
    %v2026 = vunpack.c.l.b16 %v1891
    %v2027 = vunpack.c.l.b16 %v1892
    %v2028 = vunpack.c.l.b16 %v1893
    %v2029 = vunpack.c.l.b16 %v1894
    %v2030 = vunpack.c.l.b16 %v1895
    %v2031 = vunpack.c.l.b16 %v1896
    %v2032 = vunpack.c.l.b16 %v1897
    %v2033 = vunpack.c.l.b16 %v1898
    %v2034 = vunpack.c.l.b16 %v1899
    %v2035 = vpack.c.b16 %v1972, %v1971
    %v2036 = vpack.c.b16 %v1974, %v1973
    %v2037 = vpack.c.b16 %v1976, %v1975
    %v2038 = vpack.c.b16 %v1978, %v1977
    %v2039 = vpack.c.b16 %v1980, %v1979
    %v2040 = vpack.c.b16 %v1982, %v1981
    %v2041 = vpack.c.b16 %v1984, %v1983
    %v2042 = vpack.c.b16 %v1986, %v1985
    %v2043 = vpack.c.b16 %v1988, %v1987
    %v2044 = vpack.c.b16 %v1990, %v1989
    %v2045 = vpack.c.b16 %v1992, %v1991
    %v2046 = vpack.c.b16 %v1994, %v1993
    %v2047 = vpack.c.b16 %v1996, %v1995
    %v2048 = vpack.c.b16 %v1998, %v1997
    %v2049 = vpack.c.b16 %v2000, %v1999
    %v2050 = vpack.c.b16 %v2002, %v2001
    %v2051 = vpack.c.b16 %v2004, %v2003
    %v2052 = vpack.c.b16 %v2006, %v2005
    %v2053 = vpack.c.b16 %v2008, %v2007
    %v2054 = vpack.c.b16 %v2010, %v2009
    %v2055 = vpack.c.b16 %v2012, %v2011
    %v2056 = vpack.c.b16 %v2014, %v2013
    %v2057 = vpack.c.b16 %v2016, %v2015
    %v2058 = vpack.c.b16 %v2018, %v2017
    %v2059 = vpack.c.b16 %v2020, %v2019
    %v2060 = vpack.c.b16 %v2022, %v2021
    %v2061 = vpack.c.b16 %v2024, %v2023
    %v2062 = vpack.c.b16 %v2026, %v2025
    %v2063 = vpack.c.b16 %v2028, %v2027
    %v2064 = vpack.c.b16 %v2030, %v2029
    %v2065 = vpack.c.b16 %v2032, %v2031
    %v2066 = vpack.c.b16 %v2034, %v2033
    %2099 = vmatprep.subr.bf16.mxu0 0
    %2100 = vmatpush1.bf16.msra.mxu0 %v2035
    %2101 = vmatprep.subr.bf16.mxu0 0
    %2102 = vmatpush1.bf16.msra.mxu0 %v2036
    %2103 = vmatprep.subr.bf16.mxu0 0
    %2104 = vmatpush1.bf16.msra.mxu0 %v2037
    %2105 = vmatprep.subr.bf16.mxu0 0
    %2106 = vmatpush1.bf16.msra.mxu0 %v2038
    %2107 = vmatprep.subr.bf16.mxu0 0
    %2108 = vmatpush1.bf16.msra.mxu0 %v2039
    %2109 = vmatprep.subr.bf16.mxu0 0
    %2110 = vmatpush1.bf16.msra.mxu0 %v2040
    %2111 = vmatprep.subr.bf16.mxu0 0
    %2112 = vmatpush1.bf16.msra.mxu0 %v2041
    %2113 = vmatprep.subr.bf16.mxu0 0
    %2114 = vmatpush1.bf16.msra.mxu0 %v2042
    %2115 = vmatprep.subr.bf16.mxu0 0
    %2116 = vmatpush1.bf16.msra.mxu0 %v2043
    %2117 = vmatprep.subr.bf16.mxu0 0
    %2118 = vmatpush1.bf16.msra.mxu0 %v2044
    %2119 = vmatprep.subr.bf16.mxu0 0
    %2120 = vmatpush1.bf16.msra.mxu0 %v2045
    %2121 = vmatprep.subr.bf16.mxu0 0
    %2122 = vmatpush1.bf16.msra.mxu0 %v2046
    %2123 = vmatprep.subr.bf16.mxu0 0
    %2124 = vmatpush1.bf16.msra.mxu0 %v2047
    %2125 = vmatprep.subr.bf16.mxu0 0
    %2126 = vmatpush1.bf16.msra.mxu0 %v2048
    %2127 = vmatprep.subr.bf16.mxu0 0
    %2128 = vmatpush1.bf16.msra.mxu0 %v2049
    %2129 = vmatprep.subr.bf16.mxu0 0
    %2130 = vmatpush1.bf16.msra.mxu0 %v2050
    %2131 = vmatprep.mubr.bf16.mxu0 %v1833
    %2132 = vmatmul.mubr.bf16.gmra.mrb[0].mxu0 %v1832
    %v2133 = vpop.f32.mrb[0].mxu0
    %v2134 = vadd.f32 %v1905, %v2133
    %v2135 = vpop.f32.mrb[0].mxu0
    %v2136 = vpop.f32.mrb[0].mxu0
    %v2137 = vadd.f32 %v1905, %v2136
    %v2138 = vpop.f32.mrb[0].mxu0
    %2139 = vdwg.mxu0
    %2140 = vmatprep.subr.bf16.mxu0 0
    %2141 = vmatpush1.bf16.msra.mxu0 %v2051
    %2142 = vmatprep.subr.bf16.mxu0 0
    %2143 = vmatpush1.bf16.msra.mxu0 %v2052
    %2144 = vmatprep.subr.bf16.mxu0 0
    %2145 = vmatpush1.bf16.msra.mxu0 %v2053
    %2146 = vmatprep.subr.bf16.mxu0 0
    %2147 = vmatpush1.bf16.msra.mxu0 %v2054
    %2148 = vmatprep.subr.bf16.mxu0 0
    %2149 = vmatpush1.bf16.msra.mxu0 %v2055
    %2150 = vmatprep.subr.bf16.mxu0 0
    %2151 = vmatpush1.bf16.msra.mxu0 %v2056
    %2152 = vmatprep.subr.bf16.mxu0 0
    %2153 = vmatpush1.bf16.msra.mxu0 %v2057
    %2154 = vmatprep.subr.bf16.mxu0 0
    %2155 = vmatpush1.bf16.msra.mxu0 %v2058
    %2156 = vmatprep.subr.bf16.mxu0 0
    %2157 = vmatpush1.bf16.msra.mxu0 %v2059
    %2158 = vmatprep.subr.bf16.mxu0 0
    %2159 = vmatpush1.bf16.msra.mxu0 %v2060
    %2160 = vmatprep.subr.bf16.mxu0 0
    %2161 = vmatpush1.bf16.msra.mxu0 %v2061
    %2162 = vmatprep.subr.bf16.mxu0 0
    %2163 = vmatpush1.bf16.msra.mxu0 %v2062
    %2164 = vmatprep.subr.bf16.mxu0 0
    %2165 = vmatpush1.bf16.msra.mxu0 %v2063
    %2166 = vmatprep.subr.bf16.mxu0 0
    %2167 = vmatpush1.bf16.msra.mxu0 %v2064
    %2168 = vmatprep.subr.bf16.mxu0 0
    %2169 = vmatpush1.bf16.msra.mxu0 %v2065
    %2170 = vmatprep.subr.bf16.mxu0 0
    %2171 = vmatpush1.bf16.msra.mxu0 %v2066
    %2172 = vmatprep.mubr.bf16.mxu0 %v1835
    %2173 = vmatmul.mubr.bf16.gmra.mrb[0].mxu0 %v1834
    %v2174 = vpop.f32.mrb[0].mxu0
    %v2175 = vadd.f32 %v2134, %v2174
    %v2176 = vpop.f32.mrb[0].mxu0
    %v2177 = vpop.f32.mrb[0].mxu0
    %v2178 = vadd.f32 %v2137, %v2177
    %v2179 = vpop.f32.mrb[0].mxu0
    %2180 = vdwg.mxu0
    %2181 = vst [vmem:[%s6] sm:$0xff] %v2175
    %2182 = vst [vmem:[%s6 + $0x8] sm:$0xff] %v2178
    // Predicated region
    $region30: #{neural_network_forward.2} parent=1 // pred_check
      _
    $region31: #{neural_network_forward.2} parent=1 // pred_check_branch
      %2184 = sbr.rel (0) target = $region33
    $region32: #{neural_network_forward.2} parent=1 // pred_region
      _
    $region33: #{neural_network_forward.2} parent=1 // pred_fallthru
      _
    // Predicated region
    $region34: #{neural_network_forward.2} parent=1 // pred_check
      _
    $region35: #{neural_network_forward.2} parent=1 // pred_check_branch
      %2186 = sbr.rel (0) target = $region37
    $region36: #{neural_network_forward.2} parent=1 // pred_region
      _
    $region37: #{neural_network_forward.2} parent=1 // pred_fallthru
      _
    %2187 = vsyncpa [#allocation8], 1
    %2188 = vsyncpa [#allocation10], 1

</llo_original>
